<compile_context>
chip_gen: v7x
topology: tpu7x:2x2x1
jax: 0.10.0
libtpu: 0.0.40
codegen_flags: <defaults>
</compile_context>

<pallas_src>
import functools

import jax
import jax.numpy as jnp
from jax.experimental import pallas as pl
from jax.experimental.pallas import tpu as pltpu


def _fused_autoencoder_kernel(x_ref, w0_ref, b0_ref, w1_ref, b1_ref, o_ref,
                              xbuf_ref, hbuf_ref, *, H, W, K, padl):
    """One image: ReLU(conv0(x)) -> [dropout = identity] -> ReLU(conv1(.)).

    x_ref : (Cin_p, H*W)       input, channels on sublanes, flat spatial on lanes
    w0_ref: (Cmid, K*K*Cin_p)  conv[0] weights, im2col layout, bf16
    b0_ref: (Cmid, 1)          conv[0] bias, f32
    w1_ref: (Cout, K*K*Cmid)   convup[0] weights, im2col layout, bf16
    b1_ref: (Cout, 1)          convup[0] bias, f32
    o_ref : (Cout, H*W)        output (NCHW-flat), lane-dense store
    xbuf_ref / hbuf_ref        zero lane-padded VMEM staging buffers
    """
    P = K // 2
    HW = H * W

    # Row-wrap validity masks for the horizontal taps (shared by both convs).
    xcol = jax.lax.broadcasted_iota(jnp.int32, (1, HW), 1) % W
    col_ok = [jnp.logical_and(xcol + dx >= 0, xcol + dx < W)
              for dx in range(-P, P + 1)]

    def im2col(buf_ref, val):
        # Write `val` (C, HW) into the middle of a zero lane-padded buffer, then read
        # the K*K statically shifted (C, HW) windows back and stack them along the
        # sublane axis -> (K*K*C, HW).  A 2-D shift of (dy, dx) is a shift of
        # dy*W + dx in flat lane space; rows that fall outside the image land in the
        # zero padding, and columns that wrap across image rows are masked off.
        buf_ref[...] = jnp.zeros_like(buf_ref)
        buf_ref[:, padl:padl + HW] = val
        pieces = []
        for kh in range(K):
            for kw in range(K):
                dy, dx = kh - P, kw - P
                off = padl + dy * W + dx                       # static lane offset
                win = buf_ref[:, off:off + HW]                 # (C, HW)
                pieces.append(win if dx == 0
                              else jnp.where(col_ok[dx + P], win, 0.0))
        return jnp.concatenate(pieces, axis=0)                 # (K*K*C, HW)

    # ---- conv[0]: single im2col MXU matmul (contraction = K*K*Cin_p) ----
    p0 = im2col(xbuf_ref, x_ref[...]).astype(jnp.bfloat16)
    h = jnp.dot(w0_ref[...], p0, preferred_element_type=jnp.float32)    # (Cmid, HW) f32
    h = jnp.maximum(h + b0_ref[...], 0.0)                               # bias+ReLU in f32

    # TODO(synk): eval_unet applies a freshly constructed nn.Dropout(0.25) (train-mode
    # RNG, not reproducible); it is applied as identity (inference semantics).

    # ---- convup[0]: single im2col MXU matmul; intermediate `h` never leaves VMEM ----
    p1 = im2col(hbuf_ref, h).astype(jnp.bfloat16)
    y = jnp.dot(w1_ref[...], p1, preferred_element_type=jnp.float32)    # (Cout, HW) f32
    o_ref[...] = jnp.maximum(y + b1_ref[...], 0.0).astype(o_ref.dtype)  # lane-dense store


def _autoencoder_forward_impl(x_nchw, params):
    """x_nchw: (N, Cin, H, W) f32 -> (N, Cin, H, W) f32."""
    N, Cin, H, W = x_nchw.shape
    w0, b0 = params["w_conv0"], params["b_conv0"]        # (K,K,Cin,Cmid), (Cmid,)
    w1, b1 = params["w_convup0"], params["b_convup0"]    # (K,K,Cmid,Cout), (Cout,)
    K = w0.shape[0]
    Cmid = w0.shape[-1]
    Cout = w1.shape[-1]
    P = K // 2
    HW = H * W

    # Pad Cin (3) up to a multiple of 8 so every sublane-concat offset inside the
    # kernel is 8-aligned; the padded channels are zero in both x and the weights.
    Cin_p = ((Cin + 7) // 8) * 8
    assert Cmid % 8 == 0

    # NCHW consumed directly: free spatial flatten + tiny channel zero-pad.
    x_flat = jnp.pad(x_nchw.reshape(N, Cin, HW), ((0, 0), (0, Cin_p - Cin), (0, 0)))

    # Trace-time weight prep: im2col layout (Cout, K*K*Cin), bf16 for the MXU.
    w0_p = jnp.pad(w0, ((0, 0), (0, 0), (0, Cin_p - Cin), (0, 0)))        # (K,K,Cin_p,Cmid)
    w0_2d = w0_p.reshape(K * K * Cin_p, Cmid).T.astype(jnp.bfloat16)      # (Cmid, K*K*Cin_p)
    w1_2d = w1.reshape(K * K * Cmid, Cout).T.astype(jnp.bfloat16)         # (Cout, K*K*Cmid)
    b0_c = b0.reshape(Cmid, 1).astype(jnp.float32)
    b1_c = b1.reshape(Cout, 1).astype(jnp.float32)

    # Lane padding for the in-kernel shifted windows (needs >= P*W + P per side).
    padl = ((P * W + P + 127) // 128) * 128
    buf_w = HW + 2 * padl

    kernel = functools.partial(_fused_autoencoder_kernel, H=H, W=W, K=K, padl=padl)
    out_flat = pl.pallas_call(
        kernel,
        out_shape=jax.ShapeDtypeStruct((N, Cout, HW), jnp.float32),
        grid=(N,),
        in_specs=[
            pl.BlockSpec((None, Cin_p, HW), lambda n: (n, 0, 0)),
            pl.BlockSpec((Cmid, K * K * Cin_p), lambda n: (0, 0)),
            pl.BlockSpec((Cmid, 1), lambda n: (0, 0)),
            pl.BlockSpec((Cout, K * K * Cmid), lambda n: (0, 0)),
            pl.BlockSpec((Cout, 1), lambda n: (0, 0)),
        ],
        out_specs=pl.BlockSpec((None, Cout, HW), lambda n: (n, 0, 0)),
        scratch_shapes=[
            pltpu.VMEM((Cin_p, buf_w), jnp.float32),   # lane-padded input stage
            pltpu.VMEM((Cmid, buf_w), jnp.float32),    # lane-padded intermediate stage
        ],
        compiler_params=pltpu.CompilerParams(
            dimension_semantics=("parallel",),          # one image per TensorCore on v7x
        ),
    )(x_flat, w0_2d, b0_c, w1_2d, b1_c)
    return out_flat.reshape(N, Cout, H, W)              # metadata-only reshape back to NCHW


@jax.jit
def autoencoder_forward(x_nchw, params):
    return _autoencoder_forward_impl(x_nchw, params)


def init_autoencoder_params(key, channels=(3, 16, 32, 64, 128), kernel_size=5):
    """Init only the parameters forward() actually uses (level 0: conv[0], convup[0])."""
    def conv_init(k, cin, cout, ksize):
        kw_, kb_ = jax.random.split(k)
        bound = (cin * ksize * ksize) ** -0.5            # torch Conv2d fan_in bound
        w = jax.random.uniform(kw_, (ksize, ksize, cin, cout), jnp.float32, -bound, bound)
        b = jax.random.uniform(kb_, (cout,), jnp.float32, -bound, bound)
        return w, b

    k0, k1 = jax.random.split(key)
    w_conv0, b_conv0 = conv_init(k0, channels[0], channels[1], kernel_size)      # conv[0]
    w_convup0, b_convup0 = conv_init(k1, channels[1], channels[0], kernel_size)  # convup[0]
    return {"w_conv0": w_conv0, "b_conv0": b_conv0,
            "w_convup0": w_convup0, "b_convup0": b_convup0}


def _reference_forward(x_nchw, params):
    """Pure-JAX f32 reference (same semantics) used to sanity-check the kernel."""
    dn = ("NCHW", "HWIO", "NCHW")
    def conv_relu(x, w, b):
        y = jax.lax.conv_general_dilated(x, w, (1, 1), "SAME", dimension_numbers=dn,
                                         precision=jax.lax.Precision.HIGHEST)
        return jnp.maximum(y + b.reshape(1, -1, 1, 1), 0.0)
    h = conv_relu(x_nchw, params["w_conv0"], params["b_conv0"])
    return conv_relu(h, params["w_convup0"], params["b_convup0"])


if __name__ == "__main__":
    key = jax.random.PRNGKey(0)
    k_x, k_p = jax.random.split(key)

    N, C, H, W = 2, 3, 16, 16                      # NCHW, PyTorch convention
    x = jax.random.normal(k_x, (N, C, H, W), jnp.float32)
    params = init_autoencoder_params(k_p)

    out = jax.block_until_ready(autoencoder_forward(x, params))

    assert out.shape == (N, C, H, W), out.shape
    assert out.dtype == jnp.float32
    assert bool(jnp.all(out >= 0.0))               # final ReLU

    ref = _reference_forward(x, params)
    max_err = float(jnp.max(jnp.abs(out - ref)))
    assert max_err < 5e-2, f"mismatch vs reference: {max_err}"

    print("KERNEL_OK")
</pallas_src>

<mosaic_0001>
module attributes {stable_mosaic.version = 11 : i64} {
  func.func @_fused_autoencoder_kernel(%arg0: i32, %arg1: memref<1x8x256xf32, #tpu.memory_space<vmem>>, %arg2: memref<16x200xbf16, #tpu.memory_space<vmem>>, %arg3: memref<16x1xf32, #tpu.memory_space<vmem>>, %arg4: memref<3x400xbf16, #tpu.memory_space<vmem>>, %arg5: memref<3x1xf32, #tpu.memory_space<vmem>>, %arg6: memref<1x3x256xf32, #tpu.memory_space<vmem>>, %arg7: memref<8x512xf32, #tpu.memory_space<vmem>>, %arg8: memref<16x512xf32, #tpu.memory_space<vmem>>) attributes {dimension_semantics = [#tpu.dimension_semantics<parallel>], iteration_bounds = array<i64: 2>, scalar_prefetch = 0 : i64, scratch_operands = 2 : i64, tpu.core_type = #tpu.core_type<tc>, window_params = [{transform_indices = @transform_0, window_bounds = array<i64: 1, 8, 256>}, {pipeline_mode = #tpu.pipeline_mode<synchronous>, transform_indices = @transform_1, window_bounds = array<i64: 16, 200>}, {pipeline_mode = #tpu.pipeline_mode<synchronous>, transform_indices = @transform_2, window_bounds = array<i64: 16, 1>}, {pipeline_mode = #tpu.pipeline_mode<synchronous>, transform_indices = @transform_3, window_bounds = array<i64: 3, 400>}, {pipeline_mode = #tpu.pipeline_mode<synchronous>, transform_indices = @transform_4, window_bounds = array<i64: 3, 1>}, {transform_indices = @transform_5, window_bounds = array<i64: 1, 3, 256>}]} {
    %0 = tpu.iota {dimensions = array<i32: 1>} : vector<1x256xi32>
    %c16_i32 = arith.constant 16 : i32
    %c0_i32 = arith.constant 0 : i32
    %1 = arith.cmpi eq, %c16_i32, %c0_i32 : i32
    %c1_i32 = arith.constant 1 : i32
    %2 = arith.select %1, %c1_i32, %c16_i32 : i32
    %3 = vector.broadcast %2 : i32 to vector<1x256xi32>
    %4 = arith.remsi %0, %3 : vector<1x256xi32>
    %c0_i32_0 = arith.constant 0 : i32
    %5 = vector.broadcast %c0_i32_0 : i32 to vector<1x256xi32>
    %6 = arith.cmpi ne, %4, %5 : vector<1x256xi32>
    %c0_i32_1 = arith.constant 0 : i32
    %7 = vector.broadcast %c0_i32_1 : i32 to vector<1x256xi32>
    %8 = arith.cmpi slt, %4, %7 : vector<1x256xi32>
    %c0_i32_2 = arith.constant 0 : i32
    %9 = arith.cmpi slt, %2, %c0_i32_2 : i32
    %10 = vector.broadcast %9 : i1 to vector<1x256xi1>
    %11 = vector.broadcast %10 : vector<1x256xi1> to vector<1x256xi1>
    %12 = arith.xori %8, %11 : vector<1x256xi1>
    %13 = arith.andi %12, %6 : vector<1x256xi1>
    %14 = vector.broadcast %2 : i32 to vector<1x256xi32>
    %15 = arith.addi %4, %14 : vector<1x256xi32>
    %16 = arith.select %13, %15, %4 : vector<1x256xi1>, vector<1x256xi32>
    %c-2_i32 = arith.constant -2 : i32
    %17 = vector.broadcast %c-2_i32 : i32 to vector<1x256xi32>
    %18 = arith.addi %16, %17 : vector<1x256xi32>
    %c0_i32_3 = arith.constant 0 : i32
    %19 = vector.broadcast %c0_i32_3 : i32 to vector<1x256xi32>
    %20 = arith.cmpi sge, %18, %19 : vector<1x256xi32>
    %c-2_i32_4 = arith.constant -2 : i32
    %21 = vector.broadcast %c-2_i32_4 : i32 to vector<1x256xi32>
    %22 = arith.addi %16, %21 : vector<1x256xi32>
    %c16_i32_5 = arith.constant 16 : i32
    %23 = vector.broadcast %c16_i32_5 : i32 to vector<1x256xi32>
    %24 = arith.cmpi slt, %22, %23 : vector<1x256xi32>
    %25 = arith.andi %20, %24 : vector<1x256xi1>
    %c-1_i32 = arith.constant -1 : i32
    %26 = vector.broadcast %c-1_i32 : i32 to vector<1x256xi32>
    %27 = arith.addi %16, %26 : vector<1x256xi32>
    %c0_i32_6 = arith.constant 0 : i32
    %28 = vector.broadcast %c0_i32_6 : i32 to vector<1x256xi32>
    %29 = arith.cmpi sge, %27, %28 : vector<1x256xi32>
    %c-1_i32_7 = arith.constant -1 : i32
    %30 = vector.broadcast %c-1_i32_7 : i32 to vector<1x256xi32>
    %31 = arith.addi %16, %30 : vector<1x256xi32>
    %c16_i32_8 = arith.constant 16 : i32
    %32 = vector.broadcast %c16_i32_8 : i32 to vector<1x256xi32>
    %33 = arith.cmpi slt, %31, %32 : vector<1x256xi32>
    %34 = arith.andi %29, %33 : vector<1x256xi1>
    %c1_i32_9 = arith.constant 1 : i32
    %35 = vector.broadcast %c1_i32_9 : i32 to vector<1x256xi32>
    %36 = arith.addi %16, %35 : vector<1x256xi32>
    %c0_i32_10 = arith.constant 0 : i32
    %37 = vector.broadcast %c0_i32_10 : i32 to vector<1x256xi32>
    %38 = arith.cmpi sge, %36, %37 : vector<1x256xi32>
    %c1_i32_11 = arith.constant 1 : i32
    %39 = vector.broadcast %c1_i32_11 : i32 to vector<1x256xi32>
    %40 = arith.addi %16, %39 : vector<1x256xi32>
    %c16_i32_12 = arith.constant 16 : i32
    %41 = vector.broadcast %c16_i32_12 : i32 to vector<1x256xi32>
    %42 = arith.cmpi slt, %40, %41 : vector<1x256xi32>
    %43 = arith.andi %38, %42 : vector<1x256xi1>
    %c2_i32 = arith.constant 2 : i32
    %44 = vector.broadcast %c2_i32 : i32 to vector<1x256xi32>
    %45 = arith.addi %16, %44 : vector<1x256xi32>
    %c0_i32_13 = arith.constant 0 : i32
    %46 = vector.broadcast %c0_i32_13 : i32 to vector<1x256xi32>
    %47 = arith.cmpi sge, %45, %46 : vector<1x256xi32>
    %c2_i32_14 = arith.constant 2 : i32
    %48 = vector.broadcast %c2_i32_14 : i32 to vector<1x256xi32>
    %49 = arith.addi %16, %48 : vector<1x256xi32>
    %c16_i32_15 = arith.constant 16 : i32
    %50 = vector.broadcast %c16_i32_15 : i32 to vector<1x256xi32>
    %51 = arith.cmpi slt, %49, %50 : vector<1x256xi32>
    %52 = arith.andi %47, %51 : vector<1x256xi1>
    %c0 = arith.constant 0 : index
    %c0_16 = arith.constant 0 : index
    %c0_17 = arith.constant 0 : index
    %53 = vector.load %arg1[%c0, %c0_16, %c0_17] : memref<1x8x256xf32, #tpu.memory_space<vmem>>, vector<1x8x256xf32>
    %54 = vector.shape_cast %53 : vector<1x8x256xf32> to vector<8x256xf32>
    %cst = arith.constant 0.000000e+00 : f32
    %55 = vector.broadcast %cst : f32 to vector<8x512xf32>
    %c0_18 = arith.constant 0 : index
    %c0_19 = arith.constant 0 : index
    %56 = vector.load %arg7[%c0_18, %c0_19] : memref<8x512xf32, #tpu.memory_space<vmem>>, vector<8x512xf32>
    tpu.vector_store %arg7[%c0_18, %c0_19], %55 {strides = array<i32>} : memref<8x512xf32, #tpu.memory_space<vmem>>, vector<8x512xf32>,
    %c0_20 = arith.constant 0 : index
    %c128 = arith.constant 128 : index
    %57 = vector.load %arg7[%c0_20, %c128] : memref<8x512xf32, #tpu.memory_space<vmem>>, vector<8x256xf32>
    tpu.vector_store %arg7[%c0_20, %c128], %54 {strides = array<i32>} : memref<8x512xf32, #tpu.memory_space<vmem>>, vector<8x256xf32>,
    %c0_21 = arith.constant 0 : index
    %c94 = arith.constant 94 : index
    %58 = vector.load %arg7[%c0_21, %c94] : memref<8x512xf32, #tpu.memory_space<vmem>>, vector<8x256xf32>
    %cst_22 = arith.constant 0.000000e+00 : f32
    %59 = vector.shape_cast %25 : vector<1x256xi1> to vector<1x256xi1>
    %60 = vector.broadcast %59 : vector<1x256xi1> to vector<8x256xi1>
    %61 = vector.broadcast %cst_22 : f32 to vector<8x256xf32>
    %62 = arith.select %60, %58, %61 : vector<8x256xi1>, vector<8x256xf32>
    %c0_23 = arith.constant 0 : index
    %c95 = arith.constant 95 : index
    %63 = vector.load %arg7[%c0_23, %c95] : memref<8x512xf32, #tpu.memory_space<vmem>>, vector<8x256xf32>
    %cst_24 = arith.constant 0.000000e+00 : f32
    %64 = vector.shape_cast %34 : vector<1x256xi1> to vector<1x256xi1>
    %65 = vector.broadcast %64 : vector<1x256xi1> to vector<8x256xi1>
    %66 = vector.broadcast %cst_24 : f32 to vector<8x256xf32>
    %67 = arith.select %65, %63, %66 : vector<8x256xi1>, vector<8x256xf32>
    %c0_25 = arith.constant 0 : index
    %c96 = arith.constant 96 : index
    %68 = vector.load %arg7[%c0_25, %c96] : memref<8x512xf32, #tpu.memory_space<vmem>>, vector<8x256xf32>
    %c0_26 = arith.constant 0 : index
    %c97 = arith.constant 97 : index
    %69 = vector.load %arg7[%c0_26, %c97] : memref<8x512xf32, #tpu.memory_space<vmem>>, vector<8x256xf32>
    %cst_27 = arith.constant 0.000000e+00 : f32
    %70 = vector.shape_cast %43 : vector<1x256xi1> to vector<1x256xi1>
    %71 = vector.broadcast %70 : vector<1x256xi1> to vector<8x256xi1>
    %72 = vector.broadcast %cst_27 : f32 to vector<8x256xf32>
    %73 = arith.select %71, %69, %72 : vector<8x256xi1>, vector<8x256xf32>
    %c0_28 = arith.constant 0 : index
    %c98 = arith.constant 98 : index
    %74 = vector.load %arg7[%c0_28, %c98] : memref<8x512xf32, #tpu.memory_space<vmem>>, vector<8x256xf32>
    %cst_29 = arith.constant 0.000000e+00 : f32
    %75 = vector.shape_cast %52 : vector<1x256xi1> to vector<1x256xi1>
    %76 = vector.broadcast %75 : vector<1x256xi1> to vector<8x256xi1>
    %77 = vector.broadcast %cst_29 : f32 to vector<8x256xf32>
    %78 = arith.select %76, %74, %77 : vector<8x256xi1>, vector<8x256xf32>
    %c0_30 = arith.constant 0 : index
    %c110 = arith.constant 110 : index
    %79 = vector.load %arg7[%c0_30, %c110] : memref<8x512xf32, #tpu.memory_space<vmem>>, vector<8x256xf32>
    %cst_31 = arith.constant 0.000000e+00 : f32
    %80 = vector.shape_cast %25 : vector<1x256xi1> to vector<1x256xi1>
    %81 = vector.broadcast %80 : vector<1x256xi1> to vector<8x256xi1>
    %82 = vector.broadcast %cst_31 : f32 to vector<8x256xf32>
    %83 = arith.select %81, %79, %82 : vector<8x256xi1>, vector<8x256xf32>
    %c0_32 = arith.constant 0 : index
    %c111 = arith.constant 111 : index
    %84 = vector.load %arg7[%c0_32, %c111] : memref<8x512xf32, #tpu.memory_space<vmem>>, vector<8x256xf32>
    %cst_33 = arith.constant 0.000000e+00 : f32
    %85 = vector.shape_cast %34 : vector<1x256xi1> to vector<1x256xi1>
    %86 = vector.broadcast %85 : vector<1x256xi1> to vector<8x256xi1>
    %87 = vector.broadcast %cst_33 : f32 to vector<8x256xf32>
    %88 = arith.select %86, %84, %87 : vector<8x256xi1>, vector<8x256xf32>
    %c0_34 = arith.constant 0 : index
    %c112 = arith.constant 112 : index
    %89 = vector.load %arg7[%c0_34, %c112] : memref<8x512xf32, #tpu.memory_space<vmem>>, vector<8x256xf32>
    %c0_35 = arith.constant 0 : index
    %c113 = arith.constant 113 : index
    %90 = vector.load %arg7[%c0_35, %c113] : memref<8x512xf32, #tpu.memory_space<vmem>>, vector<8x256xf32>
    %cst_36 = arith.constant 0.000000e+00 : f32
    %91 = vector.shape_cast %43 : vector<1x256xi1> to vector<1x256xi1>
    %92 = vector.broadcast %91 : vector<1x256xi1> to vector<8x256xi1>
    %93 = vector.broadcast %cst_36 : f32 to vector<8x256xf32>
    %94 = arith.select %92, %90, %93 : vector<8x256xi1>, vector<8x256xf32>
    %c0_37 = arith.constant 0 : index
    %c114 = arith.constant 114 : index
    %95 = vector.load %arg7[%c0_37, %c114] : memref<8x512xf32, #tpu.memory_space<vmem>>, vector<8x256xf32>
    %cst_38 = arith.constant 0.000000e+00 : f32
    %96 = vector.shape_cast %52 : vector<1x256xi1> to vector<1x256xi1>
    %97 = vector.broadcast %96 : vector<1x256xi1> to vector<8x256xi1>
    %98 = vector.broadcast %cst_38 : f32 to vector<8x256xf32>
    %99 = arith.select %97, %95, %98 : vector<8x256xi1>, vector<8x256xf32>
    %c0_39 = arith.constant 0 : index
    %c126 = arith.constant 126 : index
    %100 = vector.load %arg7[%c0_39, %c126] : memref<8x512xf32, #tpu.memory_space<vmem>>, vector<8x256xf32>
    %cst_40 = arith.constant 0.000000e+00 : f32
    %101 = vector.shape_cast %25 : vector<1x256xi1> to vector<1x256xi1>
    %102 = vector.broadcast %101 : vector<1x256xi1> to vector<8x256xi1>
    %103 = vector.broadcast %cst_40 : f32 to vector<8x256xf32>
    %104 = arith.select %102, %100, %103 : vector<8x256xi1>, vector<8x256xf32>
    %c0_41 = arith.constant 0 : index
    %c127 = arith.constant 127 : index
    %105 = vector.load %arg7[%c0_41, %c127] : memref<8x512xf32, #tpu.memory_space<vmem>>, vector<8x256xf32>
    %cst_42 = arith.constant 0.000000e+00 : f32
    %106 = vector.shape_cast %34 : vector<1x256xi1> to vector<1x256xi1>
    %107 = vector.broadcast %106 : vector<1x256xi1> to vector<8x256xi1>
    %108 = vector.broadcast %cst_42 : f32 to vector<8x256xf32>
    %109 = arith.select %107, %105, %108 : vector<8x256xi1>, vector<8x256xf32>
    %c0_43 = arith.constant 0 : index
    %c128_44 = arith.constant 128 : index
    %110 = vector.load %arg7[%c0_43, %c128_44] : memref<8x512xf32, #tpu.memory_space<vmem>>, vector<8x256xf32>
    %c0_45 = arith.constant 0 : index
    %c129 = arith.constant 129 : index
    %111 = vector.load %arg7[%c0_45, %c129] : memref<8x512xf32, #tpu.memory_space<vmem>>, vector<8x256xf32>
    %cst_46 = arith.constant 0.000000e+00 : f32
    %112 = vector.shape_cast %43 : vector<1x256xi1> to vector<1x256xi1>
    %113 = vector.broadcast %112 : vector<1x256xi1> to vector<8x256xi1>
    %114 = vector.broadcast %cst_46 : f32 to vector<8x256xf32>
    %115 = arith.select %113, %111, %114 : vector<8x256xi1>, vector<8x256xf32>
    %c0_47 = arith.constant 0 : index
    %c130 = arith.constant 130 : index
    %116 = vector.load %arg7[%c0_47, %c130] : memref<8x512xf32, #tpu.memory_space<vmem>>, vector<8x256xf32>
    %cst_48 = arith.constant 0.000000e+00 : f32
    %117 = vector.shape_cast %52 : vector<1x256xi1> to vector<1x256xi1>
    %118 = vector.broadcast %117 : vector<1x256xi1> to vector<8x256xi1>
    %119 = vector.broadcast %cst_48 : f32 to vector<8x256xf32>
    %120 = arith.select %118, %116, %119 : vector<8x256xi1>, vector<8x256xf32>
    %c0_49 = arith.constant 0 : index
    %c142 = arith.constant 142 : index
    %121 = vector.load %arg7[%c0_49, %c142] : memref<8x512xf32, #tpu.memory_space<vmem>>, vector<8x256xf32>
    %cst_50 = arith.constant 0.000000e+00 : f32
    %122 = vector.shape_cast %25 : vector<1x256xi1> to vector<1x256xi1>
    %123 = vector.broadcast %122 : vector<1x256xi1> to vector<8x256xi1>
    %124 = vector.broadcast %cst_50 : f32 to vector<8x256xf32>
    %125 = arith.select %123, %121, %124 : vector<8x256xi1>, vector<8x256xf32>
    %c0_51 = arith.constant 0 : index
    %c143 = arith.constant 143 : index
    %126 = vector.load %arg7[%c0_51, %c143] : memref<8x512xf32, #tpu.memory_space<vmem>>, vector<8x256xf32>
    %cst_52 = arith.constant 0.000000e+00 : f32
    %127 = vector.shape_cast %34 : vector<1x256xi1> to vector<1x256xi1>
    %128 = vector.broadcast %127 : vector<1x256xi1> to vector<8x256xi1>
    %129 = vector.broadcast %cst_52 : f32 to vector<8x256xf32>
    %130 = arith.select %128, %126, %129 : vector<8x256xi1>, vector<8x256xf32>
    %c0_53 = arith.constant 0 : index
    %c144 = arith.constant 144 : index
    %131 = vector.load %arg7[%c0_53, %c144] : memref<8x512xf32, #tpu.memory_space<vmem>>, vector<8x256xf32>
    %c0_54 = arith.constant 0 : index
    %c145 = arith.constant 145 : index
    %132 = vector.load %arg7[%c0_54, %c145] : memref<8x512xf32, #tpu.memory_space<vmem>>, vector<8x256xf32>
    %cst_55 = arith.constant 0.000000e+00 : f32
    %133 = vector.shape_cast %43 : vector<1x256xi1> to vector<1x256xi1>
    %134 = vector.broadcast %133 : vector<1x256xi1> to vector<8x256xi1>
    %135 = vector.broadcast %cst_55 : f32 to vector<8x256xf32>
    %136 = arith.select %134, %132, %135 : vector<8x256xi1>, vector<8x256xf32>
    %c0_56 = arith.constant 0 : index
    %c146 = arith.constant 146 : index
    %137 = vector.load %arg7[%c0_56, %c146] : memref<8x512xf32, #tpu.memory_space<vmem>>, vector<8x256xf32>
    %cst_57 = arith.constant 0.000000e+00 : f32
    %138 = vector.shape_cast %52 : vector<1x256xi1> to vector<1x256xi1>
    %139 = vector.broadcast %138 : vector<1x256xi1> to vector<8x256xi1>
    %140 = vector.broadcast %cst_57 : f32 to vector<8x256xf32>
    %141 = arith.select %139, %137, %140 : vector<8x256xi1>, vector<8x256xf32>
    %c0_58 = arith.constant 0 : index
    %c158 = arith.constant 158 : index
    %142 = vector.load %arg7[%c0_58, %c158] : memref<8x512xf32, #tpu.memory_space<vmem>>, vector<8x256xf32>
    %cst_59 = arith.constant 0.000000e+00 : f32
    %143 = vector.shape_cast %25 : vector<1x256xi1> to vector<1x256xi1>
    %144 = vector.broadcast %143 : vector<1x256xi1> to vector<8x256xi1>
    %145 = vector.broadcast %cst_59 : f32 to vector<8x256xf32>
    %146 = arith.select %144, %142, %145 : vector<8x256xi1>, vector<8x256xf32>
    %c0_60 = arith.constant 0 : index
    %c159 = arith.constant 159 : index
    %147 = vector.load %arg7[%c0_60, %c159] : memref<8x512xf32, #tpu.memory_space<vmem>>, vector<8x256xf32>
    %cst_61 = arith.constant 0.000000e+00 : f32
    %148 = vector.shape_cast %34 : vector<1x256xi1> to vector<1x256xi1>
    %149 = vector.broadcast %148 : vector<1x256xi1> to vector<8x256xi1>
    %150 = vector.broadcast %cst_61 : f32 to vector<8x256xf32>
    %151 = arith.select %149, %147, %150 : vector<8x256xi1>, vector<8x256xf32>
    %c0_62 = arith.constant 0 : index
    %c160 = arith.constant 160 : index
    %152 = vector.load %arg7[%c0_62, %c160] : memref<8x512xf32, #tpu.memory_space<vmem>>, vector<8x256xf32>
    %c0_63 = arith.constant 0 : index
    %c161 = arith.constant 161 : index
    %153 = vector.load %arg7[%c0_63, %c161] : memref<8x512xf32, #tpu.memory_space<vmem>>, vector<8x256xf32>
    %cst_64 = arith.constant 0.000000e+00 : f32
    %154 = vector.shape_cast %43 : vector<1x256xi1> to vector<1x256xi1>
    %155 = vector.broadcast %154 : vector<1x256xi1> to vector<8x256xi1>
    %156 = vector.broadcast %cst_64 : f32 to vector<8x256xf32>
    %157 = arith.select %155, %153, %156 : vector<8x256xi1>, vector<8x256xf32>
    %c0_65 = arith.constant 0 : index
    %c162 = arith.constant 162 : index
    %158 = vector.load %arg7[%c0_65, %c162] : memref<8x512xf32, #tpu.memory_space<vmem>>, vector<8x256xf32>
    %cst_66 = arith.constant 0.000000e+00 : f32
    %159 = vector.shape_cast %52 : vector<1x256xi1> to vector<1x256xi1>
    %160 = vector.broadcast %159 : vector<1x256xi1> to vector<8x256xi1>
    %161 = vector.broadcast %cst_66 : f32 to vector<8x256xf32>
    %162 = arith.select %160, %158, %161 : vector<8x256xi1>, vector<8x256xf32>
    %163 = tpu.concatenate %62, %67, %68, %73, %78, %83, %88, %89, %94, %99, %104, %109, %110, %115, %120, %125 in 0 : vector<8x256xf32>, vector<8x256xf32>, vector<8x256xf32>, vector<8x256xf32>, vector<8x256xf32>, vector<8x256xf32>, vector<8x256xf32>, vector<8x256xf32>, vector<8x256xf32>, vector<8x256xf32>, vector<8x256xf32>, vector<8x256xf32>, vector<8x256xf32>, vector<8x256xf32>, vector<8x256xf32>, vector<8x256xf32> -> vector<128x256xf32>
    %164 = tpu.concatenate %130, %131, %136, %141, %146, %151, %152, %157, %162 in 0 : vector<8x256xf32>, vector<8x256xf32>, vector<8x256xf32>, vector<8x256xf32>, vector<8x256xf32>, vector<8x256xf32>, vector<8x256xf32>, vector<8x256xf32>, vector<8x256xf32> -> vector<72x256xf32>
    %165 = tpu.concatenate %163, %164 in 0 : vector<128x256xf32>, vector<72x256xf32> -> vector<200x256xf32>
    %166 = arith.truncf %165 : vector<200x256xf32> to vector<200x256xbf16>
    %c0_67 = arith.constant 0 : index
    %c0_68 = arith.constant 0 : index
    %167 = vector.load %arg2[%c0_67, %c0_68] : memref<16x200xbf16, #tpu.memory_space<vmem>>, vector<16x200xbf16>
    %cst_69 = arith.constant dense<0.000000e+00> : vector<16x256xf32>
    %168 = tpu.matmul %167, %166, %cst_69 {dimension_numbers = #tpu.dot_dimension_numbers<[1], [0], [0], [1], [0, 0, 1, 1], [], []>} : vector<16x200xbf16>, vector<200x256xbf16>, vector<16x256xf32> -> vector<16x256xf32>
    %c0_70 = arith.constant 0 : index
    %c0_71 = arith.constant 0 : index
    %169 = vector.load %arg3[%c0_70, %c0_71] : memref<16x1xf32, #tpu.memory_space<vmem>>, vector<16x1xf32>
    %170 = vector.broadcast %169 : vector<16x1xf32> to vector<16x256xf32>
    %171 = arith.addf %168, %170 : vector<16x256xf32>
    %cst_72 = arith.constant 0.000000e+00 : f32
    %172 = vector.broadcast %cst_72 : f32 to vector<16x256xf32>
    %173 = arith.maximumf %171, %172 : vector<16x256xf32>
    %cst_73 = arith.constant 0.000000e+00 : f32
    %174 = vector.broadcast %cst_73 : f32 to vector<16x512xf32>
    %c0_74 = arith.constant 0 : index
    %c0_75 = arith.constant 0 : index
    %175 = vector.load %arg8[%c0_74, %c0_75] : memref<16x512xf32, #tpu.memory_space<vmem>>, vector<16x512xf32>
    tpu.vector_store %arg8[%c0_74, %c0_75], %174 {strides = array<i32>} : memref<16x512xf32, #tpu.memory_space<vmem>>, vector<16x512xf32>,
    %c0_76 = arith.constant 0 : index
    %c128_77 = arith.constant 128 : index
    %176 = vector.load %arg8[%c0_76, %c128_77] : memref<16x512xf32, #tpu.memory_space<vmem>>, vector<16x256xf32>
    tpu.vector_store %arg8[%c0_76, %c128_77], %173 {strides = array<i32>} : memref<16x512xf32, #tpu.memory_space<vmem>>, vector<16x256xf32>,
    %c0_78 = arith.constant 0 : index
    %c94_79 = arith.constant 94 : index
    %177 = vector.load %arg8[%c0_78, %c94_79] : memref<16x512xf32, #tpu.memory_space<vmem>>, vector<16x256xf32>
    %cst_80 = arith.constant 0.000000e+00 : f32
    %178 = vector.shape_cast %25 : vector<1x256xi1> to vector<1x256xi1>
    %179 = vector.broadcast %178 : vector<1x256xi1> to vector<16x256xi1>
    %180 = vector.broadcast %cst_80 : f32 to vector<16x256xf32>
    %181 = arith.select %179, %177, %180 : vector<16x256xi1>, vector<16x256xf32>
    %c0_81 = arith.constant 0 : index
    %c95_82 = arith.constant 95 : index
    %182 = vector.load %arg8[%c0_81, %c95_82] : memref<16x512xf32, #tpu.memory_space<vmem>>, vector<16x256xf32>
    %cst_83 = arith.constant 0.000000e+00 : f32
    %183 = vector.shape_cast %34 : vector<1x256xi1> to vector<1x256xi1>
    %184 = vector.broadcast %183 : vector<1x256xi1> to vector<16x256xi1>
    %185 = vector.broadcast %cst_83 : f32 to vector<16x256xf32>
    %186 = arith.select %184, %182, %185 : vector<16x256xi1>, vector<16x256xf32>
    %c0_84 = arith.constant 0 : index
    %c96_85 = arith.constant 96 : index
    %187 = vector.load %arg8[%c0_84, %c96_85] : memref<16x512xf32, #tpu.memory_space<vmem>>, vector<16x256xf32>
    %c0_86 = arith.constant 0 : index
    %c97_87 = arith.constant 97 : index
    %188 = vector.load %arg8[%c0_86, %c97_87] : memref<16x512xf32, #tpu.memory_space<vmem>>, vector<16x256xf32>
    %cst_88 = arith.constant 0.000000e+00 : f32
    %189 = vector.shape_cast %43 : vector<1x256xi1> to vector<1x256xi1>
    %190 = vector.broadcast %189 : vector<1x256xi1> to vector<16x256xi1>
    %191 = vector.broadcast %cst_88 : f32 to vector<16x256xf32>
    %192 = arith.select %190, %188, %191 : vector<16x256xi1>, vector<16x256xf32>
    %c0_89 = arith.constant 0 : index
    %c98_90 = arith.constant 98 : index
    %193 = vector.load %arg8[%c0_89, %c98_90] : memref<16x512xf32, #tpu.memory_space<vmem>>, vector<16x256xf32>
    %cst_91 = arith.constant 0.000000e+00 : f32
    %194 = vector.shape_cast %52 : vector<1x256xi1> to vector<1x256xi1>
    %195 = vector.broadcast %194 : vector<1x256xi1> to vector<16x256xi1>
    %196 = vector.broadcast %cst_91 : f32 to vector<16x256xf32>
    %197 = arith.select %195, %193, %196 : vector<16x256xi1>, vector<16x256xf32>
    %c0_92 = arith.constant 0 : index
    %c110_93 = arith.constant 110 : index
    %198 = vector.load %arg8[%c0_92, %c110_93] : memref<16x512xf32, #tpu.memory_space<vmem>>, vector<16x256xf32>
    %cst_94 = arith.constant 0.000000e+00 : f32
    %199 = vector.shape_cast %25 : vector<1x256xi1> to vector<1x256xi1>
    %200 = vector.broadcast %199 : vector<1x256xi1> to vector<16x256xi1>
    %201 = vector.broadcast %cst_94 : f32 to vector<16x256xf32>
    %202 = arith.select %200, %198, %201 : vector<16x256xi1>, vector<16x256xf32>
    %c0_95 = arith.constant 0 : index
    %c111_96 = arith.constant 111 : index
    %203 = vector.load %arg8[%c0_95, %c111_96] : memref<16x512xf32, #tpu.memory_space<vmem>>, vector<16x256xf32>
    %cst_97 = arith.constant 0.000000e+00 : f32
    %204 = vector.shape_cast %34 : vector<1x256xi1> to vector<1x256xi1>
    %205 = vector.broadcast %204 : vector<1x256xi1> to vector<16x256xi1>
    %206 = vector.broadcast %cst_97 : f32 to vector<16x256xf32>
    %207 = arith.select %205, %203, %206 : vector<16x256xi1>, vector<16x256xf32>
    %c0_98 = arith.constant 0 : index
    %c112_99 = arith.constant 112 : index
    %208 = vector.load %arg8[%c0_98, %c112_99] : memref<16x512xf32, #tpu.memory_space<vmem>>, vector<16x256xf32>
    %c0_100 = arith.constant 0 : index
    %c113_101 = arith.constant 113 : index
    %209 = vector.load %arg8[%c0_100, %c113_101] : memref<16x512xf32, #tpu.memory_space<vmem>>, vector<16x256xf32>
    %cst_102 = arith.constant 0.000000e+00 : f32
    %210 = vector.shape_cast %43 : vector<1x256xi1> to vector<1x256xi1>
    %211 = vector.broadcast %210 : vector<1x256xi1> to vector<16x256xi1>
    %212 = vector.broadcast %cst_102 : f32 to vector<16x256xf32>
    %213 = arith.select %211, %209, %212 : vector<16x256xi1>, vector<16x256xf32>
    %c0_103 = arith.constant 0 : index
    %c114_104 = arith.constant 114 : index
    %214 = vector.load %arg8[%c0_103, %c114_104] : memref<16x512xf32, #tpu.memory_space<vmem>>, vector<16x256xf32>
    %cst_105 = arith.constant 0.000000e+00 : f32
    %215 = vector.shape_cast %52 : vector<1x256xi1> to vector<1x256xi1>
    %216 = vector.broadcast %215 : vector<1x256xi1> to vector<16x256xi1>
    %217 = vector.broadcast %cst_105 : f32 to vector<16x256xf32>
    %218 = arith.select %216, %214, %217 : vector<16x256xi1>, vector<16x256xf32>
    %c0_106 = arith.constant 0 : index
    %c126_107 = arith.constant 126 : index
    %219 = vector.load %arg8[%c0_106, %c126_107] : memref<16x512xf32, #tpu.memory_space<vmem>>, vector<16x256xf32>
    %cst_108 = arith.constant 0.000000e+00 : f32
    %220 = vector.shape_cast %25 : vector<1x256xi1> to vector<1x256xi1>
    %221 = vector.broadcast %220 : vector<1x256xi1> to vector<16x256xi1>
    %222 = vector.broadcast %cst_108 : f32 to vector<16x256xf32>
    %223 = arith.select %221, %219, %222 : vector<16x256xi1>, vector<16x256xf32>
    %c0_109 = arith.constant 0 : index
    %c127_110 = arith.constant 127 : index
    %224 = vector.load %arg8[%c0_109, %c127_110] : memref<16x512xf32, #tpu.memory_space<vmem>>, vector<16x256xf32>
    %cst_111 = arith.constant 0.000000e+00 : f32
    %225 = vector.shape_cast %34 : vector<1x256xi1> to vector<1x256xi1>
    %226 = vector.broadcast %225 : vector<1x256xi1> to vector<16x256xi1>
    %227 = vector.broadcast %cst_111 : f32 to vector<16x256xf32>
    %228 = arith.select %226, %224, %227 : vector<16x256xi1>, vector<16x256xf32>
    %c0_112 = arith.constant 0 : index
    %c128_113 = arith.constant 128 : index
    %229 = vector.load %arg8[%c0_112, %c128_113] : memref<16x512xf32, #tpu.memory_space<vmem>>, vector<16x256xf32>
    %c0_114 = arith.constant 0 : index
    %c129_115 = arith.constant 129 : index
    %230 = vector.load %arg8[%c0_114, %c129_115] : memref<16x512xf32, #tpu.memory_space<vmem>>, vector<16x256xf32>
    %cst_116 = arith.constant 0.000000e+00 : f32
    %231 = vector.shape_cast %43 : vector<1x256xi1> to vector<1x256xi1>
    %232 = vector.broadcast %231 : vector<1x256xi1> to vector<16x256xi1>
    %233 = vector.broadcast %cst_116 : f32 to vector<16x256xf32>
    %234 = arith.select %232, %230, %233 : vector<16x256xi1>, vector<16x256xf32>
    %c0_117 = arith.constant 0 : index
    %c130_118 = arith.constant 130 : index
    %235 = vector.load %arg8[%c0_117, %c130_118] : memref<16x512xf32, #tpu.memory_space<vmem>>, vector<16x256xf32>
    %cst_119 = arith.constant 0.000000e+00 : f32
    %236 = vector.shape_cast %52 : vector<1x256xi1> to vector<1x256xi1>
    %237 = vector.broadcast %236 : vector<1x256xi1> to vector<16x256xi1>
    %238 = vector.broadcast %cst_119 : f32 to vector<16x256xf32>
    %239 = arith.select %237, %235, %238 : vector<16x256xi1>, vector<16x256xf32>
    %c0_120 = arith.constant 0 : index
    %c142_121 = arith.constant 142 : index
    %240 = vector.load %arg8[%c0_120, %c142_121] : memref<16x512xf32, #tpu.memory_space<vmem>>, vector<16x256xf32>
    %cst_122 = arith.constant 0.000000e+00 : f32
    %241 = vector.shape_cast %25 : vector<1x256xi1> to vector<1x256xi1>
    %242 = vector.broadcast %241 : vector<1x256xi1> to vector<16x256xi1>
    %243 = vector.broadcast %cst_122 : f32 to vector<16x256xf32>
    %244 = arith.select %242, %240, %243 : vector<16x256xi1>, vector<16x256xf32>
    %c0_123 = arith.constant 0 : index
    %c143_124 = arith.constant 143 : index
    %245 = vector.load %arg8[%c0_123, %c143_124] : memref<16x512xf32, #tpu.memory_space<vmem>>, vector<16x256xf32>
    %cst_125 = arith.constant 0.000000e+00 : f32
    %246 = vector.shape_cast %34 : vector<1x256xi1> to vector<1x256xi1>
    %247 = vector.broadcast %246 : vector<1x256xi1> to vector<16x256xi1>
    %248 = vector.broadcast %cst_125 : f32 to vector<16x256xf32>
    %249 = arith.select %247, %245, %248 : vector<16x256xi1>, vector<16x256xf32>
    %c0_126 = arith.constant 0 : index
    %c144_127 = arith.constant 144 : index
    %250 = vector.load %arg8[%c0_126, %c144_127] : memref<16x512xf32, #tpu.memory_space<vmem>>, vector<16x256xf32>
    %c0_128 = arith.constant 0 : index
    %c145_129 = arith.constant 145 : index
    %251 = vector.load %arg8[%c0_128, %c145_129] : memref<16x512xf32, #tpu.memory_space<vmem>>, vector<16x256xf32>
    %cst_130 = arith.constant 0.000000e+00 : f32
    %252 = vector.shape_cast %43 : vector<1x256xi1> to vector<1x256xi1>
    %253 = vector.broadcast %252 : vector<1x256xi1> to vector<16x256xi1>
    %254 = vector.broadcast %cst_130 : f32 to vector<16x256xf32>
    %255 = arith.select %253, %251, %254 : vector<16x256xi1>, vector<16x256xf32>
    %c0_131 = arith.constant 0 : index
    %c146_132 = arith.constant 146 : index
    %256 = vector.load %arg8[%c0_131, %c146_132] : memref<16x512xf32, #tpu.memory_space<vmem>>, vector<16x256xf32>
    %cst_133 = arith.constant 0.000000e+00 : f32
    %257 = vector.shape_cast %52 : vector<1x256xi1> to vector<1x256xi1>
    %258 = vector.broadcast %257 : vector<1x256xi1> to vector<16x256xi1>
    %259 = vector.broadcast %cst_133 : f32 to vector<16x256xf32>
    %260 = arith.select %258, %256, %259 : vector<16x256xi1>, vector<16x256xf32>
    %c0_134 = arith.constant 0 : index
    %c158_135 = arith.constant 158 : index
    %261 = vector.load %arg8[%c0_134, %c158_135] : memref<16x512xf32, #tpu.memory_space<vmem>>, vector<16x256xf32>
    %cst_136 = arith.constant 0.000000e+00 : f32
    %262 = vector.shape_cast %25 : vector<1x256xi1> to vector<1x256xi1>
    %263 = vector.broadcast %262 : vector<1x256xi1> to vector<16x256xi1>
    %264 = vector.broadcast %cst_136 : f32 to vector<16x256xf32>
    %265 = arith.select %263, %261, %264 : vector<16x256xi1>, vector<16x256xf32>
    %c0_137 = arith.constant 0 : index
    %c159_138 = arith.constant 159 : index
    %266 = vector.load %arg8[%c0_137, %c159_138] : memref<16x512xf32, #tpu.memory_space<vmem>>, vector<16x256xf32>
    %cst_139 = arith.constant 0.000000e+00 : f32
    %267 = vector.shape_cast %34 : vector<1x256xi1> to vector<1x256xi1>
    %268 = vector.broadcast %267 : vector<1x256xi1> to vector<16x256xi1>
    %269 = vector.broadcast %cst_139 : f32 to vector<16x256xf32>
    %270 = arith.select %268, %266, %269 : vector<16x256xi1>, vector<16x256xf32>
    %c0_140 = arith.constant 0 : index
    %c160_141 = arith.constant 160 : index
    %271 = vector.load %arg8[%c0_140, %c160_141] : memref<16x512xf32, #tpu.memory_space<vmem>>, vector<16x256xf32>
    %c0_142 = arith.constant 0 : index
    %c161_143 = arith.constant 161 : index
    %272 = vector.load %arg8[%c0_142, %c161_143] : memref<16x512xf32, #tpu.memory_space<vmem>>, vector<16x256xf32>
    %cst_144 = arith.constant 0.000000e+00 : f32
    %273 = vector.shape_cast %43 : vector<1x256xi1> to vector<1x256xi1>
    %274 = vector.broadcast %273 : vector<1x256xi1> to vector<16x256xi1>
    %275 = vector.broadcast %cst_144 : f32 to vector<16x256xf32>
    %276 = arith.select %274, %272, %275 : vector<16x256xi1>, vector<16x256xf32>
    %c0_145 = arith.constant 0 : index
    %c162_146 = arith.constant 162 : index
    %277 = vector.load %arg8[%c0_145, %c162_146] : memref<16x512xf32, #tpu.memory_space<vmem>>, vector<16x256xf32>
    %cst_147 = arith.constant 0.000000e+00 : f32
    %278 = vector.shape_cast %52 : vector<1x256xi1> to vector<1x256xi1>
    %279 = vector.broadcast %278 : vector<1x256xi1> to vector<16x256xi1>
    %280 = vector.broadcast %cst_147 : f32 to vector<16x256xf32>
    %281 = arith.select %279, %277, %280 : vector<16x256xi1>, vector<16x256xf32>
    %282 = tpu.concatenate %181, %186, %187, %192, %197, %202, %207, %208, %213, %218, %223, %228, %229, %234, %239, %244 in 0 : vector<16x256xf32>, vector<16x256xf32>, vector<16x256xf32>, vector<16x256xf32>, vector<16x256xf32>, vector<16x256xf32>, vector<16x256xf32>, vector<16x256xf32>, vector<16x256xf32>, vector<16x256xf32>, vector<16x256xf32>, vector<16x256xf32>, vector<16x256xf32>, vector<16x256xf32>, vector<16x256xf32>, vector<16x256xf32> -> vector<256x256xf32>
    %283 = tpu.concatenate %249, %250, %255, %260, %265, %270, %271, %276, %281 in 0 : vector<16x256xf32>, vector<16x256xf32>, vector<16x256xf32>, vector<16x256xf32>, vector<16x256xf32>, vector<16x256xf32>, vector<16x256xf32>, vector<16x256xf32>, vector<16x256xf32> -> vector<144x256xf32>
    %284 = tpu.concatenate %282, %283 in 0 : vector<256x256xf32>, vector<144x256xf32> -> vector<400x256xf32>
    %285 = arith.truncf %284 : vector<400x256xf32> to vector<400x256xbf16>
    %c0_148 = arith.constant 0 : index
    %c0_149 = arith.constant 0 : index
    %286 = vector.load %arg4[%c0_148, %c0_149] : memref<3x400xbf16, #tpu.memory_space<vmem>>, vector<3x400xbf16>
    %cst_150 = arith.constant dense<0.000000e+00> : vector<3x256xf32>
    %287 = tpu.matmul %286, %285, %cst_150 {dimension_numbers = #tpu.dot_dimension_numbers<[1], [0], [0], [1], [0, 0, 1, 1], [], []>} : vector<3x400xbf16>, vector<400x256xbf16>, vector<3x256xf32> -> vector<3x256xf32>
    %c0_151 = arith.constant 0 : index
    %c0_152 = arith.constant 0 : index
    %288 = vector.load %arg5[%c0_151, %c0_152] : memref<3x1xf32, #tpu.memory_space<vmem>>, vector<3x1xf32>
    %289 = vector.broadcast %288 : vector<3x1xf32> to vector<3x256xf32>
    %290 = arith.addf %287, %289 : vector<3x256xf32>
    %cst_153 = arith.constant 0.000000e+00 : f32
    %291 = vector.broadcast %cst_153 : f32 to vector<3x256xf32>
    %292 = arith.maximumf %290, %291 : vector<3x256xf32>
    %c0_154 = arith.constant 0 : index
    %c0_155 = arith.constant 0 : index
    %c0_156 = arith.constant 0 : index
    %293 = vector.load %arg6[%c0_154, %c0_155, %c0_156] : memref<1x3x256xf32, #tpu.memory_space<vmem>>, vector<1x3x256xf32>
    %294 = vector.shape_cast %293 : vector<1x3x256xf32> to vector<3x256xf32>
    %295 = vector.shape_cast %292 : vector<3x256xf32> to vector<1x3x256xf32>
    tpu.vector_store %arg6[%c0_154, %c0_155, %c0_156], %295 {strides = array<i32>} : memref<1x3x256xf32, #tpu.memory_space<vmem>>, vector<1x3x256xf32>,
    return
  }
  func.func @transform_0(%arg0: i32) -> (i32, i32, i32) {
    %c0_i32 = arith.constant 0 : i32
    %c0_i32_0 = arith.constant 0 : i32
    %c0_i32_1 = arith.constant 0 : i32
    return %arg0, %c0_i32, %c0_i32_0 : i32, i32, i32
  }
  func.func @transform_1(%arg0: i32) -> (i32, i32) {
    %c0_i32 = arith.constant 0 : i32
    %c0_i32_0 = arith.constant 0 : i32
    %c0_i32_1 = arith.constant 0 : i32
    return %c0_i32, %c0_i32_0 : i32, i32
  }
  func.func @transform_2(%arg0: i32) -> (i32, i32) {
    %c0_i32 = arith.constant 0 : i32
    %c0_i32_0 = arith.constant 0 : i32
    %c0_i32_1 = arith.constant 0 : i32
    return %c0_i32, %c0_i32_0 : i32, i32
  }
  func.func @transform_3(%arg0: i32) -> (i32, i32) {
    %c0_i32 = arith.constant 0 : i32
    %c0_i32_0 = arith.constant 0 : i32
    %c0_i32_1 = arith.constant 0 : i32
    return %c0_i32, %c0_i32_0 : i32, i32
  }
  func.func @transform_4(%arg0: i32) -> (i32, i32) {
    %c0_i32 = arith.constant 0 : i32
    %c0_i32_0 = arith.constant 0 : i32
    %c0_i32_1 = arith.constant 0 : i32
    return %c0_i32, %c0_i32_0 : i32, i32
  }
  func.func @transform_5(%arg0: i32) -> (i32, i32, i32) {
    %c0_i32 = arith.constant 0 : i32
    %c0_i32_0 = arith.constant 0 : i32
    %c0_i32_1 = arith.constant 0 : i32
    return %arg0, %c0_i32, %c0_i32_0 : i32, i32, i32
  }
}

</mosaic_0001>

<llo_original>
// kernel: autoencoder_forward.1
$region0: #{autoencoder_forward.1}
  #allocation0 [shape = 'u32[]', space=smem, size = 0x4, offset = 0x4, fixed_abs, tag = 'smem constant byte address 0x4 - core index']
  #allocation1 [shape = 'u32[144,128]{1,0:T(1,128)}', space=vmem, size = 0x12000, scoped, tag = 'internal scratch']
  #allocation2 [shape = 'f32[8,512]{1,0:T(8,128)}', space=vmem, size = 0x4000, scoped, tag = 'scratch operand']
  #allocation3 [shape = 'f32[16,512]{1,0:T(8,128)}', space=vmem, size = 0x8000, scoped, tag = 'scratch operand']
  %s0 = inlined_call_operand.vmem [shape: f32[2,8,256], index: 0, kind: input, shape index: {}]
  %s1 = inlined_call_operand.vmem [shape: bf16[16,200], index: 1, kind: input, shape index: {}]
  %s2 = inlined_call_operand.vmem [shape: f32[16,1], index: 2, kind: input, shape index: {}]
  %s3 = inlined_call_operand.vmem [shape: bf16[3,400], index: 3, kind: input, shape index: {}]
  %s4 = inlined_call_operand.vmem [shape: f32[3,1], index: 4, kind: input, shape index: {}]
  %s5 = inlined_call_operand.vmem [shape: f32[2,3,256], index: 5, kind: output, shape index: {}]
  %s6 = sld [smem:[#allocation0]]
  $region53: #{autoencoder_forward.1} parent=0
    _
  %s8 = ssub.s32 1, %s6
  %s9 = scalar_select 0, %s8, %s6
  loop: start=0, step=1, limit=4
  $region2: #{autoencoder_forward.1} parent=0 // loop_pre_header
    _
  $region3: #{autoencoder_forward.1} parent=0 // loop_header
    %s11 = sphi 0, %s15
    %p12 = scmp.ge.s32.totalorder %s11, 4
    %s21 = sphi 0, %s23
    %s24 = sphi 0, %s21
    %s25 = sphi 0, %s24
    %s41 = sphi 0, %s25
    %s45 = sphi 0, %s45
    %s47 = sphi 0, %s45
    %s48 = sphi 0, %s47
    %s62 = sphi 0, %s48
    %s66 = sphi 0, %s66
    %s68 = sphi 0, %s66
    %s69 = sphi 0, %s68
    %s83 = sphi 0, %s69
    %s87 = sphi 0, %s87
    %s89 = sphi 0, %s87
    %s90 = sphi 0, %s89
    %s104 = sphi 0, %s90
    %s108 = sphi 0, %s108
    %s110 = sphi 0, %s108
    %s111 = sphi 0, %s110
    %s125 = sphi 0, %s111
    %s131 = sphi 0, %s133
    %s134 = sphi 0, %s131
    %s135 = sphi 0, %s134
    %s151 = sphi 0, %s135
  $region4: #{autoencoder_forward.1} parent=0 // loop_header_branch
    %14 = sbr.rel (%p12) target = $region8
  $region5: #{autoencoder_forward.1} parent=0 // loop_body
    %s16 = ssub.s32 %s11, 1
    %s17 = ssub.s32 %s11, 2
    %s18 = sadd.s32 %s11, 1
    %s19 = ssub.s32 %s11, %s18
    %p20 = scmp.eq.s32.totalorder %s19, 0
    %s22 = sadd.s32 %s21, 1
    %s23 = scalar_select %p20, %s21, %s22
    %p26 = pneg %p20
    %p27 = scmp.eq.s32.totalorder %s11, 1
    %p28 = por %p26, %p27
    %p29 = scmp.ne.s32.totalorder %s21, %s24
    %p30 = scmp.eq.s32.totalorder %s11, 0
    %p31 = por %p29, %p30
    %p32 = scmp.ne.s32.totalorder %s21, %s24
    %p33 = scmp.eq.s32.totalorder %s16, 1
    %p34 = por %p32, %p33
    %p35 = scmp.ne.s32.totalorder %s24, %s25
    %p36 = scmp.eq.s32.totalorder %s16, 0
    %p37 = por %p35, %p36
    %p38 = scmp.ne.s32.totalorder %s24, %s25
    %p39 = scmp.eq.s32.totalorder %s17, 1
    %p40 = por %p38, %p39
    %p42 = scmp.ne.s32.totalorder %s25, %s41
    %p43 = scmp.eq.s32.totalorder %s17, 0
    %p44 = por %p42, %p43
    %s46 = sadd.s32 %s45, 1
    %p49 = scmp.eq.s32.totalorder %s11, 1
    %p50 = scmp.ne.s32.totalorder %s45, %s47
    %p51 = scmp.eq.s32.totalorder %s11, 0
    %p52 = por %p50, %p51
    %p53 = scmp.ne.s32.totalorder %s45, %s47
    %p54 = scmp.eq.s32.totalorder %s16, 1
    %p55 = por %p53, %p54
    %p56 = scmp.ne.s32.totalorder %s47, %s48
    %p57 = scmp.eq.s32.totalorder %s16, 0
    %p58 = por %p56, %p57
    %p59 = scmp.ne.s32.totalorder %s47, %s48
    %p60 = scmp.eq.s32.totalorder %s17, 1
    %p61 = por %p59, %p60
    %p63 = scmp.ne.s32.totalorder %s48, %s62
    %p64 = scmp.eq.s32.totalorder %s17, 0
    %p65 = por %p63, %p64
    %s67 = sadd.s32 %s66, 1
    %p70 = scmp.eq.s32.totalorder %s11, 1
    %p71 = scmp.ne.s32.totalorder %s66, %s68
    %p72 = scmp.eq.s32.totalorder %s11, 0
    %p73 = por %p71, %p72
    %p74 = scmp.ne.s32.totalorder %s66, %s68
    %p75 = scmp.eq.s32.totalorder %s16, 1
    %p76 = por %p74, %p75
    %p77 = scmp.ne.s32.totalorder %s68, %s69
    %p78 = scmp.eq.s32.totalorder %s16, 0
    %p79 = por %p77, %p78
    %p80 = scmp.ne.s32.totalorder %s68, %s69
    %p81 = scmp.eq.s32.totalorder %s17, 1
    %p82 = por %p80, %p81
    %p84 = scmp.ne.s32.totalorder %s69, %s83
    %p85 = scmp.eq.s32.totalorder %s17, 0
    %p86 = por %p84, %p85
    %s88 = sadd.s32 %s87, 1
    %p91 = scmp.eq.s32.totalorder %s11, 1
    %p92 = scmp.ne.s32.totalorder %s87, %s89
    %p93 = scmp.eq.s32.totalorder %s11, 0
    %p94 = por %p92, %p93
    %p95 = scmp.ne.s32.totalorder %s87, %s89
    %p96 = scmp.eq.s32.totalorder %s16, 1
    %p97 = por %p95, %p96
    %p98 = scmp.ne.s32.totalorder %s89, %s90
    %p99 = scmp.eq.s32.totalorder %s16, 0
    %p100 = por %p98, %p99
    %p101 = scmp.ne.s32.totalorder %s89, %s90
    %p102 = scmp.eq.s32.totalorder %s17, 1
    %p103 = por %p101, %p102
    %p105 = scmp.ne.s32.totalorder %s90, %s104
    %p106 = scmp.eq.s32.totalorder %s17, 0
    %p107 = por %p105, %p106
    %s109 = sadd.s32 %s108, 1
    %p112 = scmp.eq.s32.totalorder %s11, 1
    %p113 = scmp.ne.s32.totalorder %s108, %s110
    %p114 = scmp.eq.s32.totalorder %s11, 0
    %p115 = por %p113, %p114
    %p116 = scmp.ne.s32.totalorder %s108, %s110
    %p117 = scmp.eq.s32.totalorder %s16, 1
    %p118 = por %p116, %p117
    %p119 = scmp.ne.s32.totalorder %s110, %s111
    %p120 = scmp.eq.s32.totalorder %s16, 0
    %p121 = por %p119, %p120
    %p122 = scmp.ne.s32.totalorder %s110, %s111
    %p123 = scmp.eq.s32.totalorder %s17, 1
    %p124 = por %p122, %p123
    %p126 = scmp.ne.s32.totalorder %s111, %s125
    %p127 = scmp.eq.s32.totalorder %s17, 0
    %p128 = por %p126, %p127
    %s129 = ssub.s32 %s11, %s18
    %p130 = scmp.eq.s32.totalorder %s129, 0
    %s132 = sadd.s32 %s131, 1
    %s133 = scalar_select %p130, %s131, %s132
    %p136 = pneg %p130
    %p137 = scmp.eq.s32.totalorder %s11, 1
    %p138 = por %p136, %p137
    %p139 = scmp.ne.s32.totalorder %s131, %s134
    %p140 = scmp.eq.s32.totalorder %s11, 0
    %p141 = por %p139, %p140
    %p142 = scmp.ne.s32.totalorder %s131, %s134
    %p143 = scmp.eq.s32.totalorder %s16, 1
    %p144 = por %p142, %p143
    %p145 = scmp.ne.s32.totalorder %s134, %s135
    %p146 = scmp.eq.s32.totalorder %s16, 0
    %p147 = por %p145, %p146
    %p148 = scmp.ne.s32.totalorder %s134, %s135
    %p149 = scmp.eq.s32.totalorder %s17, 1
    %p150 = por %p148, %p149
    %p152 = scmp.ne.s32.totalorder %s135, %s151
    %p153 = scmp.eq.s32.totalorder %s17, 0
    %p154 = por %p152, %p153
    %p155 = scmp.le.s32.totalorder 1, %s11
    %p156 = scmp.lt.s32.totalorder %s11, 3
    %p157 = pnand %p155, %p156
    %p158 = pneg %p157
    // Predicated region
    $region9: #{autoencoder_forward.1} parent=5 // pred_check
      _
    $region10: #{autoencoder_forward.1} parent=5 // pred_check_branch
      %160 = sbr.rel (%p157) target = $region12
    $region11: #{autoencoder_forward.1} parent=5 // pred_region
      %s161 = ssub.s32 %s11, 1
      // Predicated region
      $region13: #{autoencoder_forward.1} parent=11 // pred_check
        %p162 = pneg %p58
      $region14: #{autoencoder_forward.1} parent=11 // pred_check_branch
        %164 = sbr.rel (%p162) target = $region16
      $region15: #{autoencoder_forward.1} parent=11 // pred_region
        _
      $region16: #{autoencoder_forward.1} parent=11 // pred_fallthru
        _
      // Predicated region
      $region17: #{autoencoder_forward.1} parent=11 // pred_check
        %p165 = pneg %p79
      $region18: #{autoencoder_forward.1} parent=11 // pred_check_branch
        %167 = sbr.rel (%p165) target = $region20
      $region19: #{autoencoder_forward.1} parent=11 // pred_region
        _
      $region20: #{autoencoder_forward.1} parent=11 // pred_fallthru
        _
      // Predicated region
      $region21: #{autoencoder_forward.1} parent=11 // pred_check
        %p168 = pneg %p100
      $region22: #{autoencoder_forward.1} parent=11 // pred_check_branch
        %170 = sbr.rel (%p168) target = $region24
      $region23: #{autoencoder_forward.1} parent=11 // pred_region
        _
      $region24: #{autoencoder_forward.1} parent=11 // pred_fallthru
        _
      // Predicated region
      $region25: #{autoencoder_forward.1} parent=11 // pred_check
        %p171 = pneg %p121
      $region26: #{autoencoder_forward.1} parent=11 // pred_check_branch
        %173 = sbr.rel (%p171) target = $region28
      $region27: #{autoencoder_forward.1} parent=11 // pred_region
        _
      $region28: #{autoencoder_forward.1} parent=11 // pred_fallthru
        _
    $region12: #{autoencoder_forward.1} parent=5 // pred_fallthru
      _
    %p174 = scmp.lt.s32.totalorder %s11, 2
    // Predicated region
    $region29: #{autoencoder_forward.1} parent=5 // pred_check
      %p175 = pneg %p174
    $region30: #{autoencoder_forward.1} parent=5 // pred_check_branch
      %177 = sbr.rel (%p175) target = $region32
    $region31: #{autoencoder_forward.1} parent=5 // pred_region
      // Predicated region
      $region33: #{autoencoder_forward.1} parent=31 // pred_check
        %p178 = pneg %p31
      $region34: #{autoencoder_forward.1} parent=31 // pred_check_branch
        %180 = sbr.rel (%p178) target = $region36
      $region35: #{autoencoder_forward.1} parent=31 // pred_region
        %p181 = scmp.lt.s32.totalorder %s11, 1
        %s182 = scalar_select %p181, %s11, 1
        %s183 = smul.addr %s182, 2
        %s184 = smul.addr %s183, 8
        %s185 = scalar_lea.vmem %s0, %s184
      $region36: #{autoencoder_forward.1} parent=31 // pred_fallthru
        _
    $region32: #{autoencoder_forward.1} parent=5 // pred_fallthru
      _
    %p186 = scmp.le.s32.totalorder 1, %s11
    %p187 = scmp.lt.s32.totalorder %s11, 3
    %p188 = pnand %p186, %p187
    %p189 = pneg %p188
    // Predicated region
    $region37: #{autoencoder_forward.1} parent=5 // pred_check
      _
    $region38: #{autoencoder_forward.1} parent=5 // pred_check_branch
      %191 = sbr.rel (%p188) target = $region40
    $region39: #{autoencoder_forward.1} parent=5 // pred_region
      %s192 = ssub.s32 %s11, 1
      %p193 = scmp.lt.s32.totalorder %s16, 1
      %s194 = scalar_select %p193, %s16, 1
      %s195 = smul.addr %s194, 2
      %s196 = smul.addr %s195, 8
      %s197 = scalar_lea.vmem %s0, %s196
      %p198 = pneg %p37
      %p199 = pneg %p34
      %p200 = pneg %p58
      %p201 = pneg %p55
      %p202 = pneg %p79
      %p203 = pneg %p76
      %p204 = pneg %p100
      %p205 = pneg %p97
      %p206 = pneg %p121
      %p207 = pneg %p118
      %p208 = pneg %p147
      %p209 = pneg %p144
      %p210 = scmp.lt.s32.totalorder %s16, 1
      %s211 = scalar_select %p210, %s16, 1
      %s212 = smul.addr %s211, 2
      %s213 = smul.addr %s212, 4
      %s214 = scalar_lea.vmem %s5, %s213
      %p215 = scmp.lt.s32.totalorder %s16, 1
      %s216 = scalar_select %p215, %s16, 1
      %s217 = smul.addr %s216, 2
      %s218 = smul.addr %s217, 8
      %s219 = scalar_lea.vmem %s0, %s218
      %p220 = scmp.lt.s32.totalorder %s16, 1
      %s221 = scalar_select %p220, %s16, 1
      %s222 = smul.addr %s221, 2
      %s223 = smul.addr %s222, 4
      %s224 = scalar_lea.vmem %s5, %s223
      %v226 = vlaneseq
      %v227 = vand.u32 %v226, 127
      %v228 = vadd.s32 %v227, 128
      %vm229 = vcmp.lt.s32.totalorder %v227, 0
      %v230 = vsub.s32 0, %v227
      %v231 = vsel %vm229, %v230, %v227
      %v232 = vshrl.u32 %v231, 4
      %v233 = vand.u32 %v231, 15
      %v234 = vsub.s32 0, %v233
      %v235 = vsel %vm229, %v234, %v233
      %vm236 = vcmp.lt.s32.totalorder %v228, 0
      %v237 = vsub.s32 0, %v228
      %v238 = vsel %vm236, %v237, %v228
      %v239 = vshrl.u32 %v238, 4
      %v240 = vand.u32 %v238, 15
      %v241 = vsub.s32 0, %v240
      %v242 = vsel %vm236, %v241, %v240
      %vm243 = vcmp.ne.s32.totalorder %v235, 0
      %vm244 = vcmp.ne.s32.totalorder %v242, 0
      %vm245 = vcmp.lt.s32.totalorder %v235, 0
      %vm246 = vcmp.lt.s32.totalorder %v242, 0
      %vm247 = vmand %vm245, %vm243
      %vm248 = vmand %vm246, %vm244
      %v249 = vadd.s32 %v235, 16
      %v250 = vadd.s32 %v242, 16
      %v251 = vsel %vm247, %v249, %v235
      %v252 = vsel %vm248, %v250, %v242
      %v253 = vadd.s32 %v251, 4294967294
      %v254 = vadd.s32 %v252, 4294967294
      %vm255 = vcmp.ge.s32.totalorder %v253, 0
      %vm256 = vcmp.ge.s32.totalorder %v254, 0
      %vm257 = vcmp.lt.s32.totalorder %v253, 16
      %vm258 = vcmp.lt.s32.totalorder %v254, 16
      %vm259 = vmand %vm255, %vm257
      %vm260 = vmand %vm256, %vm258
      %v261 = vadd.s32 %v251, 4294967295
      %v262 = vadd.s32 %v252, 4294967295
      %vm263 = vcmp.ge.s32.totalorder %v261, 0
      %vm264 = vcmp.ge.s32.totalorder %v262, 0
      %vm265 = vcmp.lt.s32.totalorder %v261, 16
      %vm266 = vcmp.lt.s32.totalorder %v262, 16
      %vm267 = vmand %vm263, %vm265
      %vm268 = vmand %vm264, %vm266
      %v269 = vadd.s32 %v251, 1
      %v270 = vadd.s32 %v252, 1
      %vm271 = vcmp.ge.s32.totalorder %v269, 0
      %vm272 = vcmp.ge.s32.totalorder %v270, 0
      %vm273 = vcmp.lt.s32.totalorder %v269, 16
      %vm274 = vcmp.lt.s32.totalorder %v270, 16
      %vm275 = vmand %vm271, %vm273
      %vm276 = vmand %vm272, %vm274
      %v277 = vadd.s32 %v251, 2
      %v278 = vadd.s32 %v252, 2
      %vm279 = vcmp.ge.s32.totalorder %v277, 0
      %vm280 = vcmp.ge.s32.totalorder %v278, 0
      %vm281 = vcmp.lt.s32.totalorder %v277, 16
      %vm282 = vcmp.lt.s32.totalorder %v278, 16
      %vm283 = vmand %vm279, %vm281
      %vm284 = vmand %vm280, %vm282
      %v285 = vld [vmem:[%s219] sm:$0xff]
      %v286 = vld [vmem:[%s219 + $0x8] sm:$0xff]
      %287 = vst [vmem:[#allocation2] sm:$0xff] 0.0
      %288 = vst [vmem:[#allocation2 + $0x8] sm:$0xff] 0.0
      %289 = vst [vmem:[#allocation2 + $0x10] sm:$0xff] 0.0
      %290 = vst [vmem:[#allocation2 + $0x18] sm:$0xff] 0.0
      %291 = vst [vmem:[#allocation2 + $0x8] sm:$0xff] %v285
      %292 = vst [vmem:[#allocation2 + $0x10] sm:$0xff] %v286
      %v293 = vld [vmem:[#allocation2] sm:$0xff]
      %v294 = vld [vmem:[#allocation2 + $0x8] sm:$0xff]
      %v295 = vld [vmem:[#allocation2 + $0x10] sm:$0xff]
      %v296 = vsel %vm259, 1, 0
      %v297 = vsel %vm260, 1, 0
      %vm298 = vcmp.eq.s32.totalorder %v296, 1
      %vm299 = vcmp.eq.s32.totalorder %v297, 1
      %303 = vrot.lane.b32.xlu0 %v293, 34
      %v304 = vpop.permute.xlu0 %303
      %305 = vrot.lane.b32.xlu0 %v294, 34
      %v306 = vpop.permute.xlu0 %305
      %307 = vrot.lane.b32.xlu0 %v295, 34
      %v308 = vpop.permute.xlu0 %307
      %vm309 = vcmask 277504
      %v310 = vsel %vm309, %v304, %v306
      %v311 = vsel %vm309, %v306, %v308
      %v314 = vsel %vm298, %v310, 0.0
      %v315 = vsel %vm299, %v311, 0.0
      %v316 = vsel %vm267, 1, 0
      %v317 = vsel %vm268, 1, 0
      %vm318 = vcmp.eq.s32.totalorder %v316, 1
      %vm319 = vcmp.eq.s32.totalorder %v317, 1
      %320 = vrot.lane.b32.xlu0 %v293, 33
      %v321 = vpop.permute.xlu0 %320
      %322 = vrot.lane.b32.xlu0 %v294, 33
      %v323 = vpop.permute.xlu0 %322
      %324 = vrot.lane.b32.xlu0 %v295, 33
      %v325 = vpop.permute.xlu0 %324
      %vm326 = vcmask 269312
      %v327 = vsel %vm326, %v321, %v323
      %v328 = vsel %vm326, %v323, %v325
      %v331 = vsel %vm318, %v327, 0.0
      %v332 = vsel %vm319, %v328, 0.0
      %v333 = vsel %vm275, 1, 0
      %v334 = vsel %vm276, 1, 0
      %vm335 = vcmp.eq.s32.totalorder %v333, 1
      %vm336 = vcmp.eq.s32.totalorder %v334, 1
      %337 = vrot.lane.b32.xlu0 %v293, 31
      %v338 = vpop.permute.xlu0 %337
      %339 = vrot.lane.b32.xlu0 %v294, 31
      %v340 = vpop.permute.xlu0 %339
      %341 = vrot.lane.b32.xlu0 %v295, 31
      %v342 = vpop.permute.xlu0 %341
      %vm343 = vcmask 252928
      %v344 = vsel %vm343, %v338, %v340
      %v345 = vsel %vm343, %v340, %v342
      %v348 = vsel %vm335, %v344, 0.0
      %v349 = vsel %vm336, %v345, 0.0
      %v350 = vsel %vm283, 1, 0
      %v351 = vsel %vm284, 1, 0
      %vm352 = vcmp.eq.s32.totalorder %v350, 1
      %vm353 = vcmp.eq.s32.totalorder %v351, 1
      %354 = vrot.lane.b32.xlu0 %v293, 30
      %v355 = vpop.permute.xlu0 %354
      %356 = vrot.lane.b32.xlu0 %v294, 30
      %v357 = vpop.permute.xlu0 %356
      %358 = vrot.lane.b32.xlu0 %v295, 30
      %v359 = vpop.permute.xlu0 %358
      %vm360 = vcmask 244736
      %v361 = vsel %vm360, %v355, %v357
      %v362 = vsel %vm360, %v357, %v359
      %v365 = vsel %vm352, %v361, 0.0
      %v366 = vsel %vm353, %v362, 0.0
      %367 = vrot.lane.b32.xlu0 %v293, 18
      %v368 = vpop.permute.xlu0 %367
      %369 = vrot.lane.b32.xlu0 %v294, 18
      %v370 = vpop.permute.xlu0 %369
      %371 = vrot.lane.b32.xlu0 %v295, 18
      %v372 = vpop.permute.xlu0 %371
      %vm373 = vcmask 146432
      %v374 = vsel %vm373, %v368, %v370
      %v375 = vsel %vm373, %v370, %v372
      %v378 = vsel %vm298, %v374, 0.0
      %v379 = vsel %vm299, %v375, 0.0
      %380 = vrot.lane.b32.xlu0 %v293, 17
      %v381 = vpop.permute.xlu0 %380
      %382 = vrot.lane.b32.xlu0 %v294, 17
      %v383 = vpop.permute.xlu0 %382
      %384 = vrot.lane.b32.xlu0 %v295, 17
      %v385 = vpop.permute.xlu0 %384
      %vm386 = vcmask 138240
      %v387 = vsel %vm386, %v381, %v383
      %v388 = vsel %vm386, %v383, %v385
      %v391 = vsel %vm318, %v387, 0.0
      %v392 = vsel %vm319, %v388, 0.0
      %393 = vrot.lane.b32.xlu0 %v293, 15
      %v394 = vpop.permute.xlu0 %393
      %395 = vrot.lane.b32.xlu0 %v294, 15
      %v396 = vpop.permute.xlu0 %395
      %397 = vrot.lane.b32.xlu0 %v295, 15
      %v398 = vpop.permute.xlu0 %397
      %vm399 = vcmask 121856
      %v400 = vsel %vm399, %v394, %v396
      %v401 = vsel %vm399, %v396, %v398
      %v404 = vsel %vm335, %v400, 0.0
      %v405 = vsel %vm336, %v401, 0.0
      %406 = vrot.lane.b32.xlu0 %v293, 14
      %v407 = vpop.permute.xlu0 %406
      %408 = vrot.lane.b32.xlu0 %v294, 14
      %v409 = vpop.permute.xlu0 %408
      %410 = vrot.lane.b32.xlu0 %v295, 14
      %v411 = vpop.permute.xlu0 %410
      %vm412 = vcmask 113664
      %v413 = vsel %vm412, %v407, %v409
      %v414 = vsel %vm412, %v409, %v411
      %v417 = vsel %vm352, %v413, 0.0
      %v418 = vsel %vm353, %v414, 0.0
      %419 = vrot.lane.b32.xlu0 %v293, 2
      %v420 = vpop.permute.xlu0 %419
      %421 = vrot.lane.b32.xlu0 %v294, 2
      %v422 = vpop.permute.xlu0 %421
      %423 = vrot.lane.b32.xlu0 %v295, 2
      %v424 = vpop.permute.xlu0 %423
      %vm425 = vcmask 15360
      %v426 = vsel %vm425, %v420, %v422
      %v427 = vsel %vm425, %v422, %v424
      %v430 = vsel %vm298, %v426, 0.0
      %v431 = vsel %vm299, %v427, 0.0
      %432 = vrot.lane.b32.xlu0 %v293, 1
      %v433 = vpop.permute.xlu0 %432
      %434 = vrot.lane.b32.xlu0 %v294, 1
      %v435 = vpop.permute.xlu0 %434
      %436 = vrot.lane.b32.xlu0 %v295, 1
      %v437 = vpop.permute.xlu0 %436
      %vm438 = vcmask 7168
      %v439 = vsel %vm438, %v433, %v435
      %v440 = vsel %vm438, %v435, %v437
      %v443 = vsel %vm318, %v439, 0.0
      %v444 = vsel %vm319, %v440, 0.0
      %v445 = vld [vmem:[#allocation2 + $0x8] sm:$0xff]
      %v446 = vld [vmem:[#allocation2 + $0x10] sm:$0xff]
      %v447 = vld [vmem:[#allocation2 + $0x18] sm:$0xff]
      %451 = vrot.lane.b32.xlu0 %v445, 127
      %v452 = vpop.permute.xlu0 %451
      %453 = vrot.lane.b32.xlu0 %v446, 127
      %v454 = vpop.permute.xlu0 %453
      %455 = vrot.lane.b32.xlu0 %v447, 127
      %v456 = vpop.permute.xlu0 %455
      %vm457 = vcmask 1039360
      %v458 = vsel %vm457, %v452, %v454
      %v459 = vsel %vm457, %v454, %v456
      %v462 = vsel %vm335, %v458, 0.0
      %v463 = vsel %vm336, %v459, 0.0
      %464 = vrot.lane.b32.xlu0 %v445, 126
      %v465 = vpop.permute.xlu0 %464
      %466 = vrot.lane.b32.xlu0 %v446, 126
      %v467 = vpop.permute.xlu0 %466
      %468 = vrot.lane.b32.xlu0 %v447, 126
      %v469 = vpop.permute.xlu0 %468
      %vm470 = vcmask 1031168
      %v471 = vsel %vm470, %v465, %v467
      %v472 = vsel %vm470, %v467, %v469
      %v475 = vsel %vm352, %v471, 0.0
      %v476 = vsel %vm353, %v472, 0.0
      %477 = vrot.lane.b32.xlu0 %v445, 114
      %v478 = vpop.permute.xlu0 %477
      %479 = vrot.lane.b32.xlu0 %v446, 114
      %v480 = vpop.permute.xlu0 %479
      %481 = vrot.lane.b32.xlu0 %v447, 114
      %v482 = vpop.permute.xlu0 %481
      %vm483 = vcmask 932864
      %v484 = vsel %vm483, %v478, %v480
      %v485 = vsel %vm483, %v480, %v482
      %v488 = vsel %vm298, %v484, 0.0
      %v489 = vsel %vm299, %v485, 0.0
      %490 = vrot.lane.b32.xlu0 %v445, 113
      %v491 = vpop.permute.xlu0 %490
      %492 = vrot.lane.b32.xlu0 %v446, 113
      %v493 = vpop.permute.xlu0 %492
      %494 = vrot.lane.b32.xlu0 %v447, 113
      %v495 = vpop.permute.xlu0 %494
      %vm496 = vcmask 924672
      %v497 = vsel %vm496, %v491, %v493
      %v498 = vsel %vm496, %v493, %v495
      %v501 = vsel %vm318, %v497, 0.0
      %v502 = vsel %vm319, %v498, 0.0
      %503 = vrot.lane.b32.xlu0 %v445, 111
      %v504 = vpop.permute.xlu0 %503
      %505 = vrot.lane.b32.xlu0 %v446, 111
      %v506 = vpop.permute.xlu0 %505
      %507 = vrot.lane.b32.xlu0 %v447, 111
      %v508 = vpop.permute.xlu0 %507
      %vm509 = vcmask 908288
      %v510 = vsel %vm509, %v504, %v506
      %v511 = vsel %vm509, %v506, %v508
      %v514 = vsel %vm335, %v510, 0.0
      %v515 = vsel %vm336, %v511, 0.0
      %516 = vrot.lane.b32.xlu0 %v445, 110
      %v517 = vpop.permute.xlu0 %516
      %518 = vrot.lane.b32.xlu0 %v446, 110
      %v519 = vpop.permute.xlu0 %518
      %520 = vrot.lane.b32.xlu0 %v447, 110
      %v521 = vpop.permute.xlu0 %520
      %vm522 = vcmask 900096
      %v523 = vsel %vm522, %v517, %v519
      %v524 = vsel %vm522, %v519, %v521
      %v527 = vsel %vm352, %v523, 0.0
      %v528 = vsel %vm353, %v524, 0.0
      %529 = vrot.lane.b32.xlu0 %v445, 98
      %v530 = vpop.permute.xlu0 %529
      %531 = vrot.lane.b32.xlu0 %v446, 98
      %v532 = vpop.permute.xlu0 %531
      %533 = vrot.lane.b32.xlu0 %v447, 98
      %v534 = vpop.permute.xlu0 %533
      %vm535 = vcmask 801792
      %v536 = vsel %vm535, %v530, %v532
      %v537 = vsel %vm535, %v532, %v534
      %v540 = vsel %vm298, %v536, 0.0
      %v541 = vsel %vm299, %v537, 0.0
      %542 = vrot.lane.b32.xlu0 %v445, 97
      %v543 = vpop.permute.xlu0 %542
      %544 = vrot.lane.b32.xlu0 %v446, 97
      %v545 = vpop.permute.xlu0 %544
      %546 = vrot.lane.b32.xlu0 %v447, 97
      %v547 = vpop.permute.xlu0 %546
      %vm548 = vcmask 793600
      %v549 = vsel %vm548, %v543, %v545
      %v550 = vsel %vm548, %v545, %v547
      %v553 = vsel %vm318, %v549, 0.0
      %v554 = vsel %vm319, %v550, 0.0
      %555 = vrot.lane.b32.xlu0 %v445, 95
      %v556 = vpop.permute.xlu0 %555
      %557 = vrot.lane.b32.xlu0 %v446, 95
      %v558 = vpop.permute.xlu0 %557
      %559 = vrot.lane.b32.xlu0 %v447, 95
      %v560 = vpop.permute.xlu0 %559
      %vm561 = vcmask 777216
      %v562 = vsel %vm561, %v556, %v558
      %v563 = vsel %vm561, %v558, %v560
      %v566 = vsel %vm335, %v562, 0.0
      %v567 = vsel %vm336, %v563, 0.0
      %568 = vrot.lane.b32.xlu0 %v445, 94
      %v569 = vpop.permute.xlu0 %568
      %570 = vrot.lane.b32.xlu0 %v446, 94
      %v571 = vpop.permute.xlu0 %570
      %572 = vrot.lane.b32.xlu0 %v447, 94
      %v573 = vpop.permute.xlu0 %572
      %vm574 = vcmask 769024
      %v575 = vsel %vm574, %v569, %v571
      %v576 = vsel %vm574, %v571, %v573
      %v579 = vsel %vm352, %v575, 0.0
      %v580 = vsel %vm353, %v576, 0.0
      %581 = vrot.lane.b32.xlu0 %v293, 32
      %v582 = vpop.permute.xlu0 %581
      %583 = vrot.lane.b32.xlu0 %v294, 32
      %v584 = vpop.permute.xlu0 %583
      %585 = vrot.lane.b32.xlu0 %v295, 32
      %v586 = vpop.permute.xlu0 %585
      %vm587 = vcmask 261120
      %v588 = vsel %vm587, %v582, %v584
      %v589 = vsel %vm587, %v584, %v586
      %592 = vrot.lane.b32.xlu0 %v293, 16
      %v593 = vpop.permute.xlu0 %592
      %594 = vrot.lane.b32.xlu0 %v294, 16
      %v595 = vpop.permute.xlu0 %594
      %596 = vrot.lane.b32.xlu0 %v295, 16
      %v597 = vpop.permute.xlu0 %596
      %vm598 = vcmask 130048
      %v599 = vsel %vm598, %v593, %v595
      %v600 = vsel %vm598, %v595, %v597
      %603 = vrot.lane.b32.xlu0 %v445, 112
      %v604 = vpop.permute.xlu0 %603
      %605 = vrot.lane.b32.xlu0 %v446, 112
      %v606 = vpop.permute.xlu0 %605
      %607 = vrot.lane.b32.xlu0 %v447, 112
      %v608 = vpop.permute.xlu0 %607
      %vm609 = vcmask 916480
      %v610 = vsel %vm609, %v604, %v606
      %v611 = vsel %vm609, %v606, %v608
      %614 = vrot.lane.b32.xlu0 %v445, 96
      %v615 = vpop.permute.xlu0 %614
      %616 = vrot.lane.b32.xlu0 %v446, 96
      %v617 = vpop.permute.xlu0 %616
      %618 = vrot.lane.b32.xlu0 %v447, 96
      %v619 = vpop.permute.xlu0 %618
      %vm620 = vcmask 785408
      %v621 = vsel %vm620, %v615, %v617
      %v622 = vsel %vm620, %v617, %v619
      %v625 = vpack.c.bf16 %v331, %v314
      %v626 = vpack.c.bf16 %v332, %v315
      %v627 = vpack.c.bf16 %v348, %v588
      %v628 = vpack.c.bf16 %v349, %v589
      %v629 = vpack.c.bf16 %v378, %v365
      %v630 = vpack.c.bf16 %v379, %v366
      %v631 = vpack.c.bf16 %v599, %v391
      %v632 = vpack.c.bf16 %v600, %v392
      %v633 = vpack.c.bf16 %v417, %v404
      %v634 = vpack.c.bf16 %v418, %v405
      %v635 = vpack.c.bf16 %v443, %v430
      %v636 = vpack.c.bf16 %v444, %v431
      %v637 = vpack.c.bf16 %v462, %v294
      %v638 = vpack.c.bf16 %v463, %v295
      %v639 = vpack.c.bf16 %v488, %v475
      %v640 = vpack.c.bf16 %v489, %v476
      %v641 = vpack.c.bf16 %v610, %v501
      %v642 = vpack.c.bf16 %v611, %v502
      %v643 = vpack.c.bf16 %v527, %v514
      %v644 = vpack.c.bf16 %v528, %v515
      %v645 = vpack.c.bf16 %v553, %v540
      %v646 = vpack.c.bf16 %v554, %v541
      %v647 = vpack.c.bf16 %v566, %v621
      %v648 = vpack.c.bf16 %v567, %v622
      %v649 = vpack.c.bf16 %v579, %v579
      %v650 = vpack.c.bf16 %v580, %v580
      %v651 = vld [vmem:[%s1] sm:$0xff]
      %v652 = vld [vmem:[%s1 + $0x8] sm:$0xff]
      %v653 = vld [vmem:[%s2] sm:$0xff]
      %v654 = vld [vmem:[%s2 + $0x8] sm:$0xff]
      %656 = vset.pattern.permute.xlu0 0
      %657 = vperm.xlu0 %656, %v653
      %v658 = vpop.permute.xlu0 %657
      %661 = vset.pattern.permute.xlu0 0
      %662 = vperm.xlu0 %661, %v654
      %v663 = vpop.permute.xlu0 %662
      %v667 = vunpack.c.l.b16 %v651
      %v668 = vunpack.c.h.b16 %v651
      %v669 = vunpack.c.l.b16 %v652
      %v670 = vunpack.c.h.b16 %v652
      %v671 = vpack.c.b16 %v669, %v667
      %v672 = vpack.c.b16 %v670, %v668
      %vm674 = vcmask 588800
      %v676 = vsel %vm674, %v672, 0
      %vm678 = vcmask 1043456
      %v680 = vsel %vm678, %v649, 0
      %v683 = vsel %vm678, %v650, 0
      %685 = vmatprep.subr.bf16.mxu0 %v626
      %686 = vmatpush1.bf16.msra.mxu0 %v625
      %687 = vmatprep.subr.bf16.mxu0 %v628
      %688 = vmatpush1.bf16.msra.mxu0 %v627
      %689 = vmatprep.subr.bf16.mxu0 %v630
      %690 = vmatpush1.bf16.msra.mxu0 %v629
      %691 = vmatprep.subr.bf16.mxu0 %v632
      %692 = vmatpush1.bf16.msra.mxu0 %v631
      %693 = vmatprep.subr.bf16.mxu0 %v634
      %694 = vmatpush1.bf16.msra.mxu0 %v633
      %695 = vmatprep.subr.bf16.mxu0 %v636
      %696 = vmatpush1.bf16.msra.mxu0 %v635
      %697 = vmatprep.subr.bf16.mxu0 %v638
      %698 = vmatpush1.bf16.msra.mxu0 %v637
      %699 = vmatprep.subr.bf16.mxu0 %v640
      %700 = vmatpush1.bf16.msra.mxu0 %v639
      %701 = vmatprep.subr.bf16.mxu0 %v642
      %702 = vmatpush1.bf16.msra.mxu0 %v641
      %703 = vmatprep.subr.bf16.mxu0 %v644
      %704 = vmatpush1.bf16.msra.mxu0 %v643
      %705 = vmatprep.subr.bf16.mxu0 %v646
      %706 = vmatpush1.bf16.msra.mxu0 %v645
      %707 = vmatprep.subr.bf16.mxu0 %v648
      %708 = vmatpush1.bf16.msra.mxu0 %v647
      %709 = vmatprep.subr.bf16.mxu0 %v683
      %710 = vmatpush1.bf16.msra.mxu0 %v680
      %711 = vmatprep.subr.bf16.mxu0 0
      %712 = vmatpush1.bf16.msra.mxu0 0
      %713 = vmatprep.subr.bf16.mxu0 0
      %714 = vmatpush1.bf16.msra.mxu0 0
      %715 = vmatprep.subr.bf16.mxu0 0
      %716 = vmatpush1.bf16.msra.mxu0 0
      %717 = vmatprep.mubr.bf16.mxu0 %v676
      %718 = vmatmul.mubr.bf16.gmra.mrb[0].mxu0 %v671
      %v719 = vpop.f32.mrb[0].mxu0
      %v720 = vadd.f32 %v658, %v719
      %v721 = vpop.f32.mrb[0].mxu0
      %v722 = vadd.f32 %v658, %v721
      %v723 = vpop.f32.mrb[0].mxu0
      %v724 = vadd.f32 %v663, %v723
      %v725 = vpop.f32.mrb[0].mxu0
      %v726 = vadd.f32 %v663, %v725
      %727 = vdwg.mxu0
      %v728 = vmax.f32 %v720, 0.0
      %v729 = vmax.f32 %v722, 0.0
      %v730 = vmax.f32 %v724, 0.0
      %v731 = vmax.f32 %v726, 0.0
      %732 = vst [vmem:[#allocation3] sm:$0xff] 0.0
      %733 = vst [vmem:[#allocation3 + $0x8] sm:$0xff] 0.0
      %734 = vst [vmem:[#allocation3 + $0x10] sm:$0xff] 0.0
      %735 = vst [vmem:[#allocation3 + $0x18] sm:$0xff] 0.0
      %736 = vst [vmem:[#allocation3 + $0x20] sm:$0xff] 0.0
      %737 = vst [vmem:[#allocation3 + $0x28] sm:$0xff] 0.0
      %738 = vst [vmem:[#allocation3 + $0x30] sm:$0xff] 0.0
      %739 = vst [vmem:[#allocation3 + $0x38] sm:$0xff] 0.0
      %740 = vst [vmem:[#allocation3 + $0x8] sm:$0xff] %v728
      %741 = vst [vmem:[#allocation3 + $0x10] sm:$0xff] %v729
      %742 = vst [vmem:[#allocation3 + $0x28] sm:$0xff] %v730
      %743 = vst [vmem:[#allocation3 + $0x30] sm:$0xff] %v731
      %v744 = vld [vmem:[#allocation3] sm:$0xff]
      %v745 = vld [vmem:[#allocation3 + $0x8] sm:$0xff]
      %v746 = vld [vmem:[#allocation3 + $0x10] sm:$0xff]
      %v747 = vld [vmem:[#allocation3 + $0x20] sm:$0xff]
      %v748 = vld [vmem:[#allocation3 + $0x28] sm:$0xff]
      %v749 = vld [vmem:[#allocation3 + $0x30] sm:$0xff]
      %756 = vrot.lane.b32.xlu0 %v744, 34
      %v757 = vpop.permute.xlu0 %756
      %758 = vrot.lane.b32.xlu0 %v745, 34
      %v759 = vpop.permute.xlu0 %758
      %760 = vrot.lane.b32.xlu0 %v746, 34
      %v761 = vpop.permute.xlu0 %760
      %762 = vrot.lane.b32.xlu0 %v747, 34
      %v763 = vpop.permute.xlu0 %762
      %764 = vrot.lane.b32.xlu0 %v748, 34
      %v765 = vpop.permute.xlu0 %764
      %766 = vrot.lane.b32.xlu0 %v749, 34
      %v767 = vpop.permute.xlu0 %766
      %v768 = vsel %vm309, %v757, %v759
      %v769 = vsel %vm309, %v759, %v761
      %v770 = vsel %vm309, %v763, %v765
      %v771 = vsel %vm309, %v765, %v767
      %v776 = vsel %vm298, %v768, 0.0
      %v777 = vsel %vm299, %v769, 0.0
      %v778 = vsel %vm298, %v770, 0.0
      %v779 = vsel %vm299, %v771, 0.0
      %780 = vrot.lane.b32.xlu0 %v744, 33
      %v781 = vpop.permute.xlu0 %780
      %782 = vrot.lane.b32.xlu0 %v745, 33
      %v783 = vpop.permute.xlu0 %782
      %784 = vrot.lane.b32.xlu0 %v746, 33
      %v785 = vpop.permute.xlu0 %784
      %786 = vrot.lane.b32.xlu0 %v747, 33
      %v787 = vpop.permute.xlu0 %786
      %788 = vrot.lane.b32.xlu0 %v748, 33
      %v789 = vpop.permute.xlu0 %788
      %790 = vrot.lane.b32.xlu0 %v749, 33
      %v791 = vpop.permute.xlu0 %790
      %v792 = vsel %vm326, %v781, %v783
      %v793 = vsel %vm326, %v783, %v785
      %v794 = vsel %vm326, %v787, %v789
      %v795 = vsel %vm326, %v789, %v791
      %v800 = vsel %vm318, %v792, 0.0
      %v801 = vsel %vm319, %v793, 0.0
      %v802 = vsel %vm318, %v794, 0.0
      %v803 = vsel %vm319, %v795, 0.0
      %804 = vrot.lane.b32.xlu0 %v744, 31
      %v805 = vpop.permute.xlu0 %804
      %806 = vrot.lane.b32.xlu0 %v745, 31
      %v807 = vpop.permute.xlu0 %806
      %808 = vrot.lane.b32.xlu0 %v746, 31
      %v809 = vpop.permute.xlu0 %808
      %810 = vrot.lane.b32.xlu0 %v747, 31
      %v811 = vpop.permute.xlu0 %810
      %812 = vrot.lane.b32.xlu0 %v748, 31
      %v813 = vpop.permute.xlu0 %812
      %814 = vrot.lane.b32.xlu0 %v749, 31
      %v815 = vpop.permute.xlu0 %814
      %v816 = vsel %vm343, %v805, %v807
      %v817 = vsel %vm343, %v807, %v809
      %v818 = vsel %vm343, %v811, %v813
      %v819 = vsel %vm343, %v813, %v815
      %v824 = vsel %vm335, %v816, 0.0
      %v825 = vsel %vm336, %v817, 0.0
      %v826 = vsel %vm335, %v818, 0.0
      %v827 = vsel %vm336, %v819, 0.0
      %828 = vrot.lane.b32.xlu0 %v744, 30
      %v829 = vpop.permute.xlu0 %828
      %830 = vrot.lane.b32.xlu0 %v745, 30
      %v831 = vpop.permute.xlu0 %830
      %832 = vrot.lane.b32.xlu0 %v746, 30
      %v833 = vpop.permute.xlu0 %832
      %834 = vrot.lane.b32.xlu0 %v747, 30
      %v835 = vpop.permute.xlu0 %834
      %836 = vrot.lane.b32.xlu0 %v748, 30
      %v837 = vpop.permute.xlu0 %836
      %838 = vrot.lane.b32.xlu0 %v749, 30
      %v839 = vpop.permute.xlu0 %838
      %v840 = vsel %vm360, %v829, %v831
      %v841 = vsel %vm360, %v831, %v833
      %v842 = vsel %vm360, %v835, %v837
      %v843 = vsel %vm360, %v837, %v839
      %v848 = vsel %vm352, %v840, 0.0
      %v849 = vsel %vm353, %v841, 0.0
      %v850 = vsel %vm352, %v842, 0.0
      %v851 = vsel %vm353, %v843, 0.0
      %852 = vrot.lane.b32.xlu0 %v744, 18
      %v853 = vpop.permute.xlu0 %852
      %854 = vrot.lane.b32.xlu0 %v745, 18
      %v855 = vpop.permute.xlu0 %854
      %856 = vrot.lane.b32.xlu0 %v746, 18
      %v857 = vpop.permute.xlu0 %856
      %858 = vrot.lane.b32.xlu0 %v747, 18
      %v859 = vpop.permute.xlu0 %858
      %860 = vrot.lane.b32.xlu0 %v748, 18
      %v861 = vpop.permute.xlu0 %860
      %862 = vrot.lane.b32.xlu0 %v749, 18
      %v863 = vpop.permute.xlu0 %862
      %v864 = vsel %vm373, %v853, %v855
      %v865 = vsel %vm373, %v855, %v857
      %v866 = vsel %vm373, %v859, %v861
      %v867 = vsel %vm373, %v861, %v863
      %v872 = vsel %vm298, %v864, 0.0
      %v873 = vsel %vm299, %v865, 0.0
      %v874 = vsel %vm298, %v866, 0.0
      %v875 = vsel %vm299, %v867, 0.0
      %876 = vrot.lane.b32.xlu0 %v744, 17
      %v877 = vpop.permute.xlu0 %876
      %878 = vrot.lane.b32.xlu0 %v745, 17
      %v879 = vpop.permute.xlu0 %878
      %880 = vrot.lane.b32.xlu0 %v746, 17
      %v881 = vpop.permute.xlu0 %880
      %882 = vrot.lane.b32.xlu0 %v747, 17
      %v883 = vpop.permute.xlu0 %882
      %884 = vrot.lane.b32.xlu0 %v748, 17
      %v885 = vpop.permute.xlu0 %884
      %886 = vrot.lane.b32.xlu0 %v749, 17
      %v887 = vpop.permute.xlu0 %886
      %v888 = vsel %vm386, %v877, %v879
      %v889 = vsel %vm386, %v879, %v881
      %v890 = vsel %vm386, %v883, %v885
      %v891 = vsel %vm386, %v885, %v887
      %v896 = vsel %vm318, %v888, 0.0
      %v897 = vsel %vm319, %v889, 0.0
      %v898 = vsel %vm318, %v890, 0.0
      %v899 = vsel %vm319, %v891, 0.0
      %900 = vrot.lane.b32.xlu0 %v744, 15
      %v901 = vpop.permute.xlu0 %900
      %902 = vrot.lane.b32.xlu0 %v745, 15
      %v903 = vpop.permute.xlu0 %902
      %904 = vrot.lane.b32.xlu0 %v746, 15
      %v905 = vpop.permute.xlu0 %904
      %906 = vrot.lane.b32.xlu0 %v747, 15
      %v907 = vpop.permute.xlu0 %906
      %908 = vrot.lane.b32.xlu0 %v748, 15
      %v909 = vpop.permute.xlu0 %908
      %910 = vrot.lane.b32.xlu0 %v749, 15
      %v911 = vpop.permute.xlu0 %910
      %v912 = vsel %vm399, %v901, %v903
      %v913 = vsel %vm399, %v903, %v905
      %v914 = vsel %vm399, %v907, %v909
      %v915 = vsel %vm399, %v909, %v911
      %v920 = vsel %vm335, %v912, 0.0
      %v921 = vsel %vm336, %v913, 0.0
      %v922 = vsel %vm335, %v914, 0.0
      %v923 = vsel %vm336, %v915, 0.0
      %924 = vrot.lane.b32.xlu0 %v744, 14
      %v925 = vpop.permute.xlu0 %924
      %926 = vrot.lane.b32.xlu0 %v745, 14
      %v927 = vpop.permute.xlu0 %926
      %928 = vrot.lane.b32.xlu0 %v746, 14
      %v929 = vpop.permute.xlu0 %928
      %930 = vrot.lane.b32.xlu0 %v747, 14
      %v931 = vpop.permute.xlu0 %930
      %932 = vrot.lane.b32.xlu0 %v748, 14
      %v933 = vpop.permute.xlu0 %932
      %934 = vrot.lane.b32.xlu0 %v749, 14
      %v935 = vpop.permute.xlu0 %934
      %v936 = vsel %vm412, %v925, %v927
      %v937 = vsel %vm412, %v927, %v929
      %v938 = vsel %vm412, %v931, %v933
      %v939 = vsel %vm412, %v933, %v935
      %v944 = vsel %vm352, %v936, 0.0
      %v945 = vsel %vm353, %v937, 0.0
      %v946 = vsel %vm352, %v938, 0.0
      %v947 = vsel %vm353, %v939, 0.0
      %948 = vrot.lane.b32.xlu0 %v744, 2
      %v949 = vpop.permute.xlu0 %948
      %950 = vrot.lane.b32.xlu0 %v745, 2
      %v951 = vpop.permute.xlu0 %950
      %952 = vrot.lane.b32.xlu0 %v746, 2
      %v953 = vpop.permute.xlu0 %952
      %954 = vrot.lane.b32.xlu0 %v747, 2
      %v955 = vpop.permute.xlu0 %954
      %956 = vrot.lane.b32.xlu0 %v748, 2
      %v957 = vpop.permute.xlu0 %956
      %958 = vrot.lane.b32.xlu0 %v749, 2
      %v959 = vpop.permute.xlu0 %958
      %v960 = vsel %vm425, %v949, %v951
      %v961 = vsel %vm425, %v951, %v953
      %v962 = vsel %vm425, %v955, %v957
      %v963 = vsel %vm425, %v957, %v959
      %v968 = vsel %vm298, %v960, 0.0
      %v969 = vsel %vm299, %v961, 0.0
      %v970 = vsel %vm298, %v962, 0.0
      %v971 = vsel %vm299, %v963, 0.0
      %972 = vrot.lane.b32.xlu0 %v744, 1
      %v973 = vpop.permute.xlu0 %972
      %974 = vrot.lane.b32.xlu0 %v745, 1
      %v975 = vpop.permute.xlu0 %974
      %976 = vrot.lane.b32.xlu0 %v746, 1
      %v977 = vpop.permute.xlu0 %976
      %978 = vrot.lane.b32.xlu0 %v747, 1
      %v979 = vpop.permute.xlu0 %978
      %980 = vrot.lane.b32.xlu0 %v748, 1
      %v981 = vpop.permute.xlu0 %980
      %982 = vrot.lane.b32.xlu0 %v749, 1
      %v983 = vpop.permute.xlu0 %982
      %v984 = vsel %vm438, %v973, %v975
      %v985 = vsel %vm438, %v975, %v977
      %v986 = vsel %vm438, %v979, %v981
      %v987 = vsel %vm438, %v981, %v983
      %v992 = vsel %vm318, %v984, 0.0
      %v993 = vsel %vm319, %v985, 0.0
      %v994 = vsel %vm318, %v986, 0.0
      %v995 = vsel %vm319, %v987, 0.0
      %v996 = vld [vmem:[#allocation3 + $0x8] sm:$0xff]
      %v997 = vld [vmem:[#allocation3 + $0x10] sm:$0xff]
      %v998 = vld [vmem:[#allocation3 + $0x18] sm:$0xff]
      %v999 = vld [vmem:[#allocation3 + $0x28] sm:$0xff]
      %v1000 = vld [vmem:[#allocation3 + $0x30] sm:$0xff]
      %v1001 = vld [vmem:[#allocation3 + $0x38] sm:$0xff]
      %1008 = vrot.lane.b32.xlu0 %v996, 127
      %v1009 = vpop.permute.xlu0 %1008
      %1010 = vrot.lane.b32.xlu0 %v997, 127
      %v1011 = vpop.permute.xlu0 %1010
      %1012 = vrot.lane.b32.xlu0 %v998, 127
      %v1013 = vpop.permute.xlu0 %1012
      %1014 = vrot.lane.b32.xlu0 %v999, 127
      %v1015 = vpop.permute.xlu0 %1014
      %1016 = vrot.lane.b32.xlu0 %v1000, 127
      %v1017 = vpop.permute.xlu0 %1016
      %1018 = vrot.lane.b32.xlu0 %v1001, 127
      %v1019 = vpop.permute.xlu0 %1018
      %v1020 = vsel %vm457, %v1009, %v1011
      %v1021 = vsel %vm457, %v1011, %v1013
      %v1022 = vsel %vm457, %v1015, %v1017
      %v1023 = vsel %vm457, %v1017, %v1019
      %v1028 = vsel %vm335, %v1020, 0.0
      %v1029 = vsel %vm336, %v1021, 0.0
      %v1030 = vsel %vm335, %v1022, 0.0
      %v1031 = vsel %vm336, %v1023, 0.0
      %1032 = vrot.lane.b32.xlu0 %v996, 126
      %v1033 = vpop.permute.xlu0 %1032
      %1034 = vrot.lane.b32.xlu0 %v997, 126
      %v1035 = vpop.permute.xlu0 %1034
      %1036 = vrot.lane.b32.xlu0 %v998, 126
      %v1037 = vpop.permute.xlu0 %1036
      %1038 = vrot.lane.b32.xlu0 %v999, 126
      %v1039 = vpop.permute.xlu0 %1038
      %1040 = vrot.lane.b32.xlu0 %v1000, 126
      %v1041 = vpop.permute.xlu0 %1040
      %1042 = vrot.lane.b32.xlu0 %v1001, 126
      %v1043 = vpop.permute.xlu0 %1042
      %v1044 = vsel %vm470, %v1033, %v1035
      %v1045 = vsel %vm470, %v1035, %v1037
      %v1046 = vsel %vm470, %v1039, %v1041
      %v1047 = vsel %vm470, %v1041, %v1043
      %v1052 = vsel %vm352, %v1044, 0.0
      %v1053 = vsel %vm353, %v1045, 0.0
      %v1054 = vsel %vm352, %v1046, 0.0
      %v1055 = vsel %vm353, %v1047, 0.0
      %1056 = vrot.lane.b32.xlu0 %v996, 114
      %v1057 = vpop.permute.xlu0 %1056
      %1058 = vrot.lane.b32.xlu0 %v997, 114
      %v1059 = vpop.permute.xlu0 %1058
      %1060 = vrot.lane.b32.xlu0 %v998, 114
      %v1061 = vpop.permute.xlu0 %1060
      %1062 = vrot.lane.b32.xlu0 %v999, 114
      %v1063 = vpop.permute.xlu0 %1062
      %1064 = vrot.lane.b32.xlu0 %v1000, 114
      %v1065 = vpop.permute.xlu0 %1064
      %1066 = vrot.lane.b32.xlu0 %v1001, 114
      %v1067 = vpop.permute.xlu0 %1066
      %v1068 = vsel %vm483, %v1057, %v1059
      %v1069 = vsel %vm483, %v1059, %v1061
      %v1070 = vsel %vm483, %v1063, %v1065
      %v1071 = vsel %vm483, %v1065, %v1067
      %v1076 = vsel %vm298, %v1068, 0.0
      %v1077 = vsel %vm299, %v1069, 0.0
      %v1078 = vsel %vm298, %v1070, 0.0
      %v1079 = vsel %vm299, %v1071, 0.0
      %1080 = vrot.lane.b32.xlu0 %v996, 113
      %v1081 = vpop.permute.xlu0 %1080
      %1082 = vrot.lane.b32.xlu0 %v997, 113
      %v1083 = vpop.permute.xlu0 %1082
      %1084 = vrot.lane.b32.xlu0 %v998, 113
      %v1085 = vpop.permute.xlu0 %1084
      %1086 = vrot.lane.b32.xlu0 %v999, 113
      %v1087 = vpop.permute.xlu0 %1086
      %1088 = vrot.lane.b32.xlu0 %v1000, 113
      %v1089 = vpop.permute.xlu0 %1088
      %1090 = vrot.lane.b32.xlu0 %v1001, 113
      %v1091 = vpop.permute.xlu0 %1090
      %v1092 = vsel %vm496, %v1081, %v1083
      %v1093 = vsel %vm496, %v1083, %v1085
      %v1094 = vsel %vm496, %v1087, %v1089
      %v1095 = vsel %vm496, %v1089, %v1091
      %v1100 = vsel %vm318, %v1092, 0.0
      %v1101 = vsel %vm319, %v1093, 0.0
      %v1102 = vsel %vm318, %v1094, 0.0
      %v1103 = vsel %vm319, %v1095, 0.0
      %1104 = vrot.lane.b32.xlu0 %v996, 111
      %v1105 = vpop.permute.xlu0 %1104
      %1106 = vrot.lane.b32.xlu0 %v997, 111
      %v1107 = vpop.permute.xlu0 %1106
      %1108 = vrot.lane.b32.xlu0 %v998, 111
      %v1109 = vpop.permute.xlu0 %1108
      %1110 = vrot.lane.b32.xlu0 %v999, 111
      %v1111 = vpop.permute.xlu0 %1110
      %1112 = vrot.lane.b32.xlu0 %v1000, 111
      %v1113 = vpop.permute.xlu0 %1112
      %1114 = vrot.lane.b32.xlu0 %v1001, 111
      %v1115 = vpop.permute.xlu0 %1114
      %v1116 = vsel %vm509, %v1105, %v1107
      %v1117 = vsel %vm509, %v1107, %v1109
      %v1118 = vsel %vm509, %v1111, %v1113
      %v1119 = vsel %vm509, %v1113, %v1115
      %v1124 = vsel %vm335, %v1116, 0.0
      %v1125 = vsel %vm336, %v1117, 0.0
      %v1126 = vsel %vm335, %v1118, 0.0
      %v1127 = vsel %vm336, %v1119, 0.0
      %1128 = vrot.lane.b32.xlu0 %v996, 110
      %v1129 = vpop.permute.xlu0 %1128
      %1130 = vrot.lane.b32.xlu0 %v997, 110
      %v1131 = vpop.permute.xlu0 %1130
      %1132 = vrot.lane.b32.xlu0 %v998, 110
      %v1133 = vpop.permute.xlu0 %1132
      %1134 = vrot.lane.b32.xlu0 %v999, 110
      %v1135 = vpop.permute.xlu0 %1134
      %1136 = vrot.lane.b32.xlu0 %v1000, 110
      %v1137 = vpop.permute.xlu0 %1136
      %1138 = vrot.lane.b32.xlu0 %v1001, 110
      %v1139 = vpop.permute.xlu0 %1138
      %v1140 = vsel %vm522, %v1129, %v1131
      %v1141 = vsel %vm522, %v1131, %v1133
      %v1142 = vsel %vm522, %v1135, %v1137
      %v1143 = vsel %vm522, %v1137, %v1139
      %v1148 = vsel %vm352, %v1140, 0.0
      %v1149 = vsel %vm353, %v1141, 0.0
      %v1150 = vsel %vm352, %v1142, 0.0
      %v1151 = vsel %vm353, %v1143, 0.0
      %1152 = vrot.lane.b32.xlu0 %v996, 98
      %v1153 = vpop.permute.xlu0 %1152
      %1154 = vrot.lane.b32.xlu0 %v997, 98
      %v1155 = vpop.permute.xlu0 %1154
      %1156 = vrot.lane.b32.xlu0 %v998, 98
      %v1157 = vpop.permute.xlu0 %1156
      %1158 = vrot.lane.b32.xlu0 %v999, 98
      %v1159 = vpop.permute.xlu0 %1158
      %1160 = vrot.lane.b32.xlu0 %v1000, 98
      %v1161 = vpop.permute.xlu0 %1160
      %1162 = vrot.lane.b32.xlu0 %v1001, 98
      %v1163 = vpop.permute.xlu0 %1162
      %v1164 = vsel %vm535, %v1153, %v1155
      %v1165 = vsel %vm535, %v1155, %v1157
      %v1166 = vsel %vm535, %v1159, %v1161
      %v1167 = vsel %vm535, %v1161, %v1163
      %v1172 = vsel %vm298, %v1164, 0.0
      %v1173 = vsel %vm299, %v1165, 0.0
      %v1174 = vsel %vm298, %v1166, 0.0
      %v1175 = vsel %vm299, %v1167, 0.0
      %1176 = vrot.lane.b32.xlu0 %v996, 97
      %v1177 = vpop.permute.xlu0 %1176
      %1178 = vrot.lane.b32.xlu0 %v997, 97
      %v1179 = vpop.permute.xlu0 %1178
      %1180 = vrot.lane.b32.xlu0 %v998, 97
      %v1181 = vpop.permute.xlu0 %1180
      %1182 = vrot.lane.b32.xlu0 %v999, 97
      %v1183 = vpop.permute.xlu0 %1182
      %1184 = vrot.lane.b32.xlu0 %v1000, 97
      %v1185 = vpop.permute.xlu0 %1184
      %1186 = vrot.lane.b32.xlu0 %v1001, 97
      %v1187 = vpop.permute.xlu0 %1186
      %v1188 = vsel %vm548, %v1177, %v1179
      %v1189 = vsel %vm548, %v1179, %v1181
      %v1190 = vsel %vm548, %v1183, %v1185
      %v1191 = vsel %vm548, %v1185, %v1187
      %v1196 = vsel %vm318, %v1188, 0.0
      %v1197 = vsel %vm319, %v1189, 0.0
      %v1198 = vsel %vm318, %v1190, 0.0
      %v1199 = vsel %vm319, %v1191, 0.0
      %1200 = vrot.lane.b32.xlu0 %v996, 95
      %v1201 = vpop.permute.xlu0 %1200
      %1202 = vrot.lane.b32.xlu0 %v997, 95
      %v1203 = vpop.permute.xlu0 %1202
      %1204 = vrot.lane.b32.xlu0 %v998, 95
      %v1205 = vpop.permute.xlu0 %1204
      %1206 = vrot.lane.b32.xlu0 %v999, 95
      %v1207 = vpop.permute.xlu0 %1206
      %1208 = vrot.lane.b32.xlu0 %v1000, 95
      %v1209 = vpop.permute.xlu0 %1208
      %1210 = vrot.lane.b32.xlu0 %v1001, 95
      %v1211 = vpop.permute.xlu0 %1210
      %v1212 = vsel %vm561, %v1201, %v1203
      %v1213 = vsel %vm561, %v1203, %v1205
      %v1214 = vsel %vm561, %v1207, %v1209
      %v1215 = vsel %vm561, %v1209, %v1211
      %v1220 = vsel %vm335, %v1212, 0.0
      %v1221 = vsel %vm336, %v1213, 0.0
      %v1222 = vsel %vm335, %v1214, 0.0
      %v1223 = vsel %vm336, %v1215, 0.0
      %1224 = vrot.lane.b32.xlu0 %v996, 94
      %v1225 = vpop.permute.xlu0 %1224
      %1226 = vrot.lane.b32.xlu0 %v997, 94
      %v1227 = vpop.permute.xlu0 %1226
      %1228 = vrot.lane.b32.xlu0 %v998, 94
      %v1229 = vpop.permute.xlu0 %1228
      %1230 = vrot.lane.b32.xlu0 %v999, 94
      %v1231 = vpop.permute.xlu0 %1230
      %1232 = vrot.lane.b32.xlu0 %v1000, 94
      %v1233 = vpop.permute.xlu0 %1232
      %1234 = vrot.lane.b32.xlu0 %v1001, 94
      %v1235 = vpop.permute.xlu0 %1234
      %v1236 = vsel %vm574, %v1225, %v1227
      %v1237 = vsel %vm574, %v1227, %v1229
      %v1238 = vsel %vm574, %v1231, %v1233
      %v1239 = vsel %vm574, %v1233, %v1235
      %v1244 = vsel %vm352, %v1236, 0.0
      %v1245 = vsel %vm353, %v1237, 0.0
      %v1246 = vsel %vm352, %v1238, 0.0
      %v1247 = vsel %vm353, %v1239, 0.0
      %1248 = vrot.lane.b32.xlu0 %v744, 32
      %v1249 = vpop.permute.xlu0 %1248
      %1250 = vrot.lane.b32.xlu0 %v745, 32
      %v1251 = vpop.permute.xlu0 %1250
      %1252 = vrot.lane.b32.xlu0 %v746, 32
      %v1253 = vpop.permute.xlu0 %1252
      %1254 = vrot.lane.b32.xlu0 %v747, 32
      %v1255 = vpop.permute.xlu0 %1254
      %1256 = vrot.lane.b32.xlu0 %v748, 32
      %v1257 = vpop.permute.xlu0 %1256
      %1258 = vrot.lane.b32.xlu0 %v749, 32
      %v1259 = vpop.permute.xlu0 %1258
      %v1260 = vsel %vm587, %v1249, %v1251
      %v1261 = vsel %vm587, %v1251, %v1253
      %v1262 = vsel %vm587, %v1255, %v1257
      %v1263 = vsel %vm587, %v1257, %v1259
      %1268 = vrot.lane.b32.xlu0 %v744, 16
      %v1269 = vpop.permute.xlu0 %1268
      %1270 = vrot.lane.b32.xlu0 %v745, 16
      %v1271 = vpop.permute.xlu0 %1270
      %1272 = vrot.lane.b32.xlu0 %v746, 16
      %v1273 = vpop.permute.xlu0 %1272
      %1274 = vrot.lane.b32.xlu0 %v747, 16
      %v1275 = vpop.permute.xlu0 %1274
      %1276 = vrot.lane.b32.xlu0 %v748, 16
      %v1277 = vpop.permute.xlu0 %1276
      %1278 = vrot.lane.b32.xlu0 %v749, 16
      %v1279 = vpop.permute.xlu0 %1278
      %v1280 = vsel %vm598, %v1269, %v1271
      %v1281 = vsel %vm598, %v1271, %v1273
      %v1282 = vsel %vm598, %v1275, %v1277
      %v1283 = vsel %vm598, %v1277, %v1279
      %1288 = vrot.lane.b32.xlu0 %v996, 112
      %v1289 = vpop.permute.xlu0 %1288
      %1290 = vrot.lane.b32.xlu0 %v997, 112
      %v1291 = vpop.permute.xlu0 %1290
      %1292 = vrot.lane.b32.xlu0 %v998, 112
      %v1293 = vpop.permute.xlu0 %1292
      %1294 = vrot.lane.b32.xlu0 %v999, 112
      %v1295 = vpop.permute.xlu0 %1294
      %1296 = vrot.lane.b32.xlu0 %v1000, 112
      %v1297 = vpop.permute.xlu0 %1296
      %1298 = vrot.lane.b32.xlu0 %v1001, 112
      %v1299 = vpop.permute.xlu0 %1298
      %v1300 = vsel %vm609, %v1289, %v1291
      %v1301 = vsel %vm609, %v1291, %v1293
      %v1302 = vsel %vm609, %v1295, %v1297
      %v1303 = vsel %vm609, %v1297, %v1299
      %1308 = vrot.lane.b32.xlu0 %v996, 96
      %v1309 = vpop.permute.xlu0 %1308
      %1310 = vrot.lane.b32.xlu0 %v997, 96
      %v1311 = vpop.permute.xlu0 %1310
      %1312 = vrot.lane.b32.xlu0 %v998, 96
      %v1313 = vpop.permute.xlu0 %1312
      %1314 = vrot.lane.b32.xlu0 %v999, 96
      %v1315 = vpop.permute.xlu0 %1314
      %1316 = vrot.lane.b32.xlu0 %v1000, 96
      %v1317 = vpop.permute.xlu0 %1316
      %1318 = vrot.lane.b32.xlu0 %v1001, 96
      %v1319 = vpop.permute.xlu0 %1318
      %v1320 = vsel %vm620, %v1309, %v1311
      %v1321 = vsel %vm620, %v1311, %v1313
      %v1322 = vsel %vm620, %v1315, %v1317
      %v1323 = vsel %vm620, %v1317, %v1319
      %v1328 = vpack.c.bf16 %v778, %v776
      %v1329 = vpack.c.bf16 %v779, %v777
      %v1330 = vpack.c.bf16 %v802, %v800
      %v1331 = vpack.c.bf16 %v803, %v801
      %v1332 = vpack.c.bf16 %v1262, %v1260
      %v1333 = vpack.c.bf16 %v1263, %v1261
      %v1334 = vpack.c.bf16 %v826, %v824
      %v1335 = vpack.c.bf16 %v827, %v825
      %v1336 = vpack.c.bf16 %v850, %v848
      %v1337 = vpack.c.bf16 %v851, %v849
      %v1338 = vpack.c.bf16 %v874, %v872
      %v1339 = vpack.c.bf16 %v875, %v873
      %v1340 = vpack.c.bf16 %v898, %v896
      %v1341 = vpack.c.bf16 %v899, %v897
      %v1342 = vpack.c.bf16 %v1282, %v1280
      %v1343 = vpack.c.bf16 %v1283, %v1281
      %v1344 = vpack.c.bf16 %v922, %v920
      %v1345 = vpack.c.bf16 %v923, %v921
      %v1346 = vpack.c.bf16 %v946, %v944
      %v1347 = vpack.c.bf16 %v947, %v945
      %v1348 = vpack.c.bf16 %v970, %v968
      %v1349 = vpack.c.bf16 %v971, %v969
      %v1350 = vpack.c.bf16 %v994, %v992
      %v1351 = vpack.c.bf16 %v995, %v993
      %v1352 = vpack.c.bf16 %v748, %v745
      %v1353 = vpack.c.bf16 %v749, %v746
      %v1354 = vpack.c.bf16 %v1030, %v1028
      %v1355 = vpack.c.bf16 %v1031, %v1029
      %v1356 = vpack.c.bf16 %v1054, %v1052
      %v1357 = vpack.c.bf16 %v1055, %v1053
      %v1358 = vpack.c.bf16 %v1078, %v1076
      %v1359 = vpack.c.bf16 %v1079, %v1077
      %v1360 = vpack.c.bf16 %v1102, %v1100
      %v1361 = vpack.c.bf16 %v1103, %v1101
      %v1362 = vpack.c.bf16 %v1302, %v1300
      %v1363 = vpack.c.bf16 %v1303, %v1301
      %v1364 = vpack.c.bf16 %v1126, %v1124
      %v1365 = vpack.c.bf16 %v1127, %v1125
      %v1366 = vpack.c.bf16 %v1150, %v1148
      %v1367 = vpack.c.bf16 %v1151, %v1149
      %v1368 = vpack.c.bf16 %v1174, %v1172
      %v1369 = vpack.c.bf16 %v1175, %v1173
      %v1370 = vpack.c.bf16 %v1198, %v1196
      %v1371 = vpack.c.bf16 %v1199, %v1197
      %v1372 = vpack.c.bf16 %v1322, %v1320
      %v1373 = vpack.c.bf16 %v1323, %v1321
      %v1374 = vpack.c.bf16 %v1222, %v1220
      %v1375 = vpack.c.bf16 %v1223, %v1221
      %v1376 = vpack.c.bf16 %v1246, %v1244
      %v1377 = vpack.c.bf16 %v1247, %v1245
      %v1378 = vld [vmem:[%s3] sm:$0xff]
      %v1379 = vld [vmem:[%s4] sm:$0x7]
      %1381 = vset.pattern.permute.xlu0 0
      %1382 = vperm.xlu0 %1381, %v1379
      %v1383 = vpop.permute.xlu0 %1382
      %v1386 = vcombine.high %v1378, %v1378
      %v1388 = vunpack.c.l.s4 1983009808
      %v1389 = vunpack.c.0.s8 %v1388
      %v1390 = vlaneseq
      %v1391 = vshrl.u32 %v1390, 7
      %v1392 = vsub.s32 %v1389, %v1391
      %v1393 = vrot.slane %v1378, %v1392
      %v1395 = vunpack.c.l.s4 1983009808
      %v1396 = vunpack.c.0.s8 %v1395
      %v1397 = vlaneseq
      %v1398 = vshrl.u32 %v1397, 7
      %v1399 = vsub.s32 %v1396, %v1398
      %v1400 = vrot.slane %v1386, %v1399
      %v1401 = vcombine.high %v1393, %v1393
      %v1402 = vcombine.high %v1400, %v1400
      %v1407 = vsel %vm598, %v1402, 0
      %1409 = vmatprep.subr.bf16.mxu0 %v1329
      %1410 = vmatpush1.bf16.msra.mxu0 %v1328
      %1411 = vmatprep.subr.bf16.mxu0 %v1331
      %1412 = vmatpush1.bf16.msra.mxu0 %v1330
      %1413 = vmatprep.subr.bf16.mxu0 %v1333
      %1414 = vmatpush1.bf16.msra.mxu0 %v1332
      %1415 = vmatprep.subr.bf16.mxu0 %v1335
      %1416 = vmatpush1.bf16.msra.mxu0 %v1334
      %1417 = vmatprep.subr.bf16.mxu0 %v1337
      %1418 = vmatpush1.bf16.msra.mxu0 %v1336
      %1419 = vmatprep.subr.bf16.mxu0 %v1339
      %1420 = vmatpush1.bf16.msra.mxu0 %v1338
      %1421 = vmatprep.subr.bf16.mxu0 %v1341
      %1422 = vmatpush1.bf16.msra.mxu0 %v1340
      %1423 = vmatprep.subr.bf16.mxu0 %v1343
      %1424 = vmatpush1.bf16.msra.mxu0 %v1342
      %1425 = vmatprep.subr.bf16.mxu0 %v1345
      %1426 = vmatpush1.bf16.msra.mxu0 %v1344
      %1427 = vmatprep.subr.bf16.mxu0 %v1347
      %1428 = vmatpush1.bf16.msra.mxu0 %v1346
      %1429 = vmatprep.subr.bf16.mxu0 %v1349
      %1430 = vmatpush1.bf16.msra.mxu0 %v1348
      %1431 = vmatprep.subr.bf16.mxu0 %v1351
      %1432 = vmatpush1.bf16.msra.mxu0 %v1350
      %1433 = vmatprep.subr.bf16.mxu0 %v1353
      %1434 = vmatpush1.bf16.msra.mxu0 %v1352
      %1435 = vmatprep.subr.bf16.mxu0 %v1355
      %1436 = vmatpush1.bf16.msra.mxu0 %v1354
      %1437 = vmatprep.subr.bf16.mxu0 %v1357
      %1438 = vmatpush1.bf16.msra.mxu0 %v1356
      %1439 = vmatprep.subr.bf16.mxu0 %v1359
      %1440 = vmatpush1.bf16.msra.mxu0 %v1358
      %1441 = vmatprep.mubr.bf16.mxu0 %v1401
      %1442 = vmatmul.mubr.bf16.gmra.mrb[0].mxu0 %v1393
      %v1443 = vpop.f32.mrb[0].mxu0
      %v1444 = vadd.f32 %v1383, %v1443
      %v1445 = vpop.f32.mrb[0].mxu0
      %v1446 = vadd.f32 %v1383, %v1445
      %v1447 = vpop.f32.mrb[0].mxu0
      %v1448 = vpop.f32.mrb[0].mxu0
      %1449 = vdwg.mxu0
      %1450 = vmatprep.subr.bf16.mxu0 %v1361
      %1451 = vmatpush1.bf16.msra.mxu0 %v1360
      %1452 = vmatprep.subr.bf16.mxu0 %v1363
      %1453 = vmatpush1.bf16.msra.mxu0 %v1362
      %1454 = vmatprep.subr.bf16.mxu0 %v1365
      %1455 = vmatpush1.bf16.msra.mxu0 %v1364
      %1456 = vmatprep.subr.bf16.mxu0 %v1367
      %1457 = vmatpush1.bf16.msra.mxu0 %v1366
      %1458 = vmatprep.subr.bf16.mxu0 %v1369
      %1459 = vmatpush1.bf16.msra.mxu0 %v1368
      %1460 = vmatprep.subr.bf16.mxu0 %v1371
      %1461 = vmatpush1.bf16.msra.mxu0 %v1370
      %1462 = vmatprep.subr.bf16.mxu0 %v1373
      %1463 = vmatpush1.bf16.msra.mxu0 %v1372
      %1464 = vmatprep.subr.bf16.mxu0 %v1375
      %1465 = vmatpush1.bf16.msra.mxu0 %v1374
      %1466 = vmatprep.subr.bf16.mxu0 %v1377
      %1467 = vmatpush1.bf16.msra.mxu0 %v1376
      %1468 = vmatprep.subr.bf16.mxu0 0
      %1469 = vmatpush1.bf16.msra.mxu0 0
      %1470 = vmatprep.subr.bf16.mxu0 0
      %1471 = vmatpush1.bf16.msra.mxu0 0
      %1472 = vmatprep.subr.bf16.mxu0 0
      %1473 = vmatpush1.bf16.msra.mxu0 0
      %1474 = vmatprep.subr.bf16.mxu0 0
      %1475 = vmatpush1.bf16.msra.mxu0 0
      %1476 = vmatprep.subr.bf16.mxu0 0
      %1477 = vmatpush1.bf16.msra.mxu0 0
      %1478 = vmatprep.subr.bf16.mxu0 0
      %1479 = vmatpush1.bf16.msra.mxu0 0
      %1480 = vmatprep.subr.bf16.mxu0 0
      %1481 = vmatpush1.bf16.msra.mxu0 0
      %1482 = vmatprep.mubr.bf16.mxu0 %v1407
      %1483 = vmatmul.mubr.bf16.gmra.mrb[0].mxu0 %v1400
      %v1484 = vpop.f32.mrb[0].mxu0
      %v1485 = vadd.f32 %v1444, %v1484
      %v1486 = vpop.f32.mrb[0].mxu0
      %v1487 = vadd.f32 %v1446, %v1486
      %v1488 = vpop.f32.mrb[0].mxu0
      %v1489 = vpop.f32.mrb[0].mxu0
      %1490 = vdwg.mxu0
      %v1491 = vmax.f32 %v1485, 0.0
      %v1492 = vmax.f32 %v1487, 0.0
      %v1495 = vcombine.low %v1491, %v1492
      %1497 = vst [vmem:[%s224] sm:$0x77] %v1495
      %p1498 = scmp.lt.s32.totalorder %s16, 1
      %s1499 = scalar_select %p1498, %s16, 1
      %s1500 = smul.addr %s1499, 2
      %s1501 = smul.addr %s1500, 4
      %s1502 = scalar_lea.vmem %s5, %s1501
      // Predicated region
      $region41: #{autoencoder_forward.1} parent=39 // pred_check
        %p1503 = pneg %p144
      $region42: #{autoencoder_forward.1} parent=39 // pred_check_branch
        %1505 = sbr.rel (%p1503) target = $region44
      $region43: #{autoencoder_forward.1} parent=39 // pred_region
        _
      $region44: #{autoencoder_forward.1} parent=39 // pred_fallthru
        _
    $region40: #{autoencoder_forward.1} parent=5 // pred_fallthru
      _
    %p1506 = scmp.le.s32.totalorder 2, %s11
    // Predicated region
    $region45: #{autoencoder_forward.1} parent=5 // pred_check
      %p1507 = pneg %p1506
    $region46: #{autoencoder_forward.1} parent=5 // pred_check_branch
      %1509 = sbr.rel (%p1507) target = $region48
    $region47: #{autoencoder_forward.1} parent=5 // pred_region
      %s1510 = ssub.s32 %s11, 2
      // Predicated region
      $region49: #{autoencoder_forward.1} parent=47 // pred_check
        %p1511 = pneg %p150
      $region50: #{autoencoder_forward.1} parent=47 // pred_check_branch
        %1513 = sbr.rel (%p1511) target = $region52
      $region51: #{autoencoder_forward.1} parent=47 // pred_region
        %p1514 = scmp.lt.s32.totalorder %s17, 1
        %s1515 = scalar_select %p1514, %s17, 1
        %s1516 = smul.addr %s1515, 2
        %s1517 = smul.addr %s1516, 4
        %s1518 = scalar_lea.vmem %s5, %s1517
      $region52: #{autoencoder_forward.1} parent=47 // pred_fallthru
        _
    $region48: #{autoencoder_forward.1} parent=5 // pred_fallthru
      _
  $region6: #{autoencoder_forward.1} parent=0 // loop_footer
    %s15 = sadd.s32 1, %s11
  $region7: #{autoencoder_forward.1} parent=0 // loop_footer_branch
    %10 = sbr.rel target = $region3
  $region8: #{autoencoder_forward.1} parent=0 // loop_exit
    _

</llo_original>
